<compile_context>
chip_gen: v7x
topology: tpu7x:2x2x1
jax: 0.10.0
libtpu: 0.0.40
codegen_flags: <defaults>
</compile_context>

<pallas_src>
import functools

import numpy as np
import jax
import jax.numpy as jnp
from jax import lax
from jax.experimental import pallas as pl
from jax.experimental.pallas import tpu as pltpu


def _vmem_budget():
    """~75% of the device's VMEM, with a conservative fallback."""
    try:
        info = pltpu.get_tpu_info()
        cap = int(getattr(info, "vmem_capacity_bytes", 64 << 20))
    except Exception:
        cap = 64 << 20
    return max(16 << 20, (cap * 3) // 4)


def _pick_tile_p(hw, h, w, c, vmem_budget_bytes):
    """Largest lane-dense (multiple of 128) pixel tile whose per-tile working
    set fits the VMEM budget; capped at 2048 lanes."""
    # per-lane f32 cost: iota/mask/weight slabs over H and W (few copies), the
    # (C*H, tile) matmul result, and a handful of (1, tile) vectors.
    per_lane = 4 * (3 * (h + w) + 2 * c * h + 16)
    resident = 2 * (c * h * w * 4)                # double-buffered image block
    avail = max(vmem_budget_bytes - resident - (2 << 20), 4 << 20)
    cap = max(128, min(2048, (avail // per_lane) // 128 * 128))
    return int(min(cap, pl.cdiv(hw, 128) * 128))


def _depth_projecter_kernel(cam_ref, pix_ref, depth_ref, img_ref,
                            out_ref, mask_ref, *, height, width):
    f32 = jnp.float32
    b = pl.program_id(0)
    C = out_ref.shape[1]
    TILE_P = out_ref.shape[2]

    # Folded camera model (SMEM scalars): proj = depth * (M @ [x, y, 1]) + t
    # cam rows: [M00..M22, t0, t1, t2] with M = (K@T)[:3,:3] @ invK[:3,:3].
    def c(k):
        return cam_ref[b, k]

    px = pix_ref[0:1, :]                               # (1, TILE_P)
    py = pix_ref[1:2, :]
    d = depth_ref[0]                                   # (1, TILE_P)

    X = d * (c(0) * px + c(1) * py + c(2)) + c(9)
    Y = d * (c(3) * px + c(4) * py + c(5)) + c(10)
    Z = d * (c(6) * px + c(7) * py + c(8)) + c(11)

    inv = 1.0 / (Z + 1e-8)          # one divide, reused for x and y
    x = X * inv
    y = Y * inv

    # grid_sample(align_corners=True): the gx->ix normalization round trip
    # cancels algebraically; padding_mode='border' becomes a clamp of the
    # sampling coordinate.  NOTE: this clamp is what guarantees the x0+1/y0+1
    # corner carries exactly zero weight whenever it falls outside the image,
    # so the weight slabs below need no border select.
    ix = jnp.clip(x, 0.0, float(width - 1))
    iy = jnp.clip(y, 0.0, float(height - 1))
    x0f = jnp.floor(ix)
    y0f = jnp.floor(iy)
    tx = ix - x0f
    ty = iy - y0f
    x0 = x0f.astype(jnp.int32)                         # (1, TILE_P)
    y0 = y0f.astype(jnp.int32)

    # Separable bilinear weight slabs: wx[w, p] and wy[h, p].
    wi = lax.broadcasted_iota(jnp.int32, (width, TILE_P), 0)
    wx = ((1.0 - tx) * (wi == x0).astype(f32)
          + tx * (wi == x0 + 1).astype(f32))           # (W, TILE_P)
    hi = lax.broadcasted_iota(jnp.int32, (height, TILE_P), 0)
    wy = ((1.0 - ty) * (hi == y0).astype(f32)
          + ty * (hi == y0 + 1).astype(f32))           # (H, TILE_P)

    # Column gather on the MXU: (C*H, W) @ (W, TILE_P) -> (C*H, TILE_P).
    # HIGHEST kept: M=C*H / K=W makes it cheap and preserves f32 parity.
    img2d = img_ref[0]                                 # (C*H, W), f32
    tmp = jnp.dot(img2d, wx, preferred_element_type=f32,
                  precision=lax.Precision.HIGHEST)

    # Row combine: per channel, weighted sum over H with wy.
    chans = []
    for ci in range(C):
        sl = tmp[ci * height:(ci + 1) * height, :]     # (H, TILE_P)
        chans.append(jnp.sum(sl * wy, axis=0, keepdims=True))
    warped = chans[0] if C == 1 else jnp.concatenate(chans, axis=0)
    out_ref[0] = warped.astype(out_ref.dtype)

    in_x = (x >= 0.0) & (x <= float(width - 1))
    in_y = (y >= 0.0) & (y <= float(height - 1))
    mask_ref[0] = (in_x & in_y).astype(mask_ref.dtype)


class DepthProjecter:
    """JAX/Pallas port of models.networks.ocfd_net.DepthProjecter."""

    def __init__(self, image_size):
        self.height, self.width = int(image_size[0]), int(image_size[1])
        H, W = self.height, self.width
        xs, ys = np.meshgrid(range(W), range(H), indexing="xy")
        pix = np.stack([xs.reshape(-1), ys.reshape(-1)], 0).astype(np.float32)
        ones = np.ones((1, H * W), np.float32)
        # (3, HW) exactly as the torch module (used by the reference).
        self.pix_coords = jnp.asarray(np.concatenate([pix, ones], 0))
        # (2, HW) [x; y] rows for the kernel (the homogeneous 1 is folded
        # into the camera constants).
        self.pix_xy = jnp.asarray(pix)

    def __call__(self, depth, inv_K, T, K, img, is_mask=False):
        H, W = self.height, self.width
        HW = H * W
        B = depth.shape[0]
        C = img.shape[1]

        vmem_limit = _vmem_budget()
        TILE_P = _pick_tile_p(HW, H, W, C, vmem_limit)
        HWp = pl.cdiv(HW, TILE_P) * TILE_P
        NP = HWp // TILE_P

        depth_flat = depth.reshape(B, 1, HW).astype(jnp.float32)
        pix_xy = self.pix_xy
        if HWp != HW:
            pad = HWp - HW
            # padded pixels compute garbage that is sliced off below; pad with
            # benign values so no inf/NaN leaks into the (dropped) lanes.
            pix_xy = jnp.pad(pix_xy, ((0, 0), (0, pad)))
            depth_flat = jnp.pad(depth_flat, ((0, 0), (0, 0), (0, pad)),
                                 constant_values=1.0)

        # Image as (B, C*H, W), cast once to f32 (MXU operand).
        img2d = img.reshape(B, C * H, W).astype(jnp.float32)

        # Fold (K @ T)[:, :3, :3] @ inv_K[:, :3, :3] + translation column into
        # 12 scalars per batch (SMEM).  HIGHEST so the fold itself is exact.
        hp = lax.Precision.HIGHEST
        P = jnp.matmul(K, T, precision=hp)[:, :3, :].astype(jnp.float32)
        M = jnp.matmul(P[:, :, :3], inv_K[:, :3, :3].astype(jnp.float32),
                       precision=hp)
        cam = jnp.concatenate([M.reshape(B, 9), P[:, :, 3]], axis=1)  # (B,12)

        kernel = functools.partial(_depth_projecter_kernel, height=H, width=W)
        warped_flat, mask_flat = pl.pallas_call(
            kernel,
            grid=(B, NP),
            in_specs=[
                # camera constants, whole array in SMEM
                pl.BlockSpec(memory_space=pltpu.MemorySpace.SMEM),
                # pixel coordinates for this output tile
                pl.BlockSpec((2, TILE_P), lambda b, j: (0, j)),
                # depth for this output tile
                pl.BlockSpec((1, 1, TILE_P), lambda b, j: (b, 0, j)),
                # full image for this batch (resident across the tile axis)
                pl.BlockSpec((1, C * H, W), lambda b, j: (b, 0, 0)),
            ],
            out_specs=[
                pl.BlockSpec((1, C, TILE_P), lambda b, j: (b, 0, j)),
                pl.BlockSpec((1, 1, TILE_P), lambda b, j: (b, 0, j)),
            ],
            out_shape=[
                jax.ShapeDtypeStruct((B, C, HWp), img.dtype),
                jax.ShapeDtypeStruct((B, 1, HWp), jnp.float32),
            ],
            compiler_params=pltpu.CompilerParams(
                dimension_semantics=("parallel", "parallel"),
                vmem_limit_bytes=int(vmem_limit)),
        )(cam, pix_xy, depth_flat, img2d)

        warped = warped_flat[:, :, :HW].reshape(B, C, H, W)
        mask = mask_flat[:, :, :HW].reshape(B, 1, H, W) if is_mask else None
        return warped, mask


def _reference(pix, depth, inv_K, T, K, img, H, W):
    """Pure-JAX reference mirroring the torch module (f32 throughout)."""
    B, C = img.shape[0], img.shape[1]
    HW = H * W
    hp = lax.Precision.HIGHEST
    cam = jnp.matmul(inv_K[:, :3, :3], pix[None], precision=hp)       # (B,3,HW)
    cam = depth.reshape(B, 1, HW) * cam
    cam = jnp.concatenate([cam, jnp.ones((B, 1, HW), jnp.float32)], 1)
    P = jnp.matmul(K, T, precision=hp)[:, :3, :]
    cam = jnp.matmul(P, cam, precision=hp)
    pix2 = cam[:, :2, :] / (cam[:, 2:3, :] + 1e-8)
    pix2 = pix2.reshape(B, 2, H, W).transpose(0, 2, 3, 1)
    gx = (pix2[..., 0] / (W - 1) - 0.5) * 2.0
    gy = (pix2[..., 1] / (H - 1) - 0.5) * 2.0
    ix = jnp.clip((gx + 1.0) * 0.5 * (W - 1), 0.0, W - 1.0)
    iy = jnp.clip((gy + 1.0) * 0.5 * (H - 1), 0.0, H - 1.0)
    x0f, y0f = jnp.floor(ix), jnp.floor(iy)
    tx, ty = ix - x0f, iy - y0f
    x0, y0 = x0f.astype(jnp.int32), y0f.astype(jnp.int32)
    x1, y1 = jnp.minimum(x0 + 1, W - 1), jnp.minimum(y0 + 1, H - 1)
    imgf = img.reshape(B, C, HW)

    def gather(yq, xq):
        idx = (yq * W + xq).reshape(B, 1, HW)
        idx = jnp.broadcast_to(idx, (B, C, HW))
        return jnp.take_along_axis(imgf, idx, axis=2).reshape(B, C, H, W)

    w00 = ((1 - tx) * (1 - ty))[:, None]
    w01 = (tx * (1 - ty))[:, None]
    w10 = ((1 - tx) * ty)[:, None]
    w11 = (tx * ty)[:, None]
    warped = (w00 * gather(y0, x0) + w01 * gather(y0, x1)
              + w10 * gather(y1, x0) + w11 * gather(y1, x1))
    mask = (((gx >= -1) & (gx <= 1)) & ((gy >= -1) & (gy <= 1)))
    mask = mask.astype(jnp.float32)[:, None]
    return warped, mask


if __name__ == "__main__":
    B, C, H, W = 2, 4, 16, 16
    key = jax.random.PRNGKey(0)
    k1, k2, k3, k4 = jax.random.split(key, 4)

    # deterministic synthetic camera intrinsics / extrinsics
    fx, fy = 0.58 * W, 1.92 * H
    cx, cy = 0.5 * W, 0.5 * H
    K1 = jnp.array([[fx, 0.0, cx, 0.0],
                    [0.0, fy, cy, 0.0],
                    [0.0, 0.0, 1.0, 0.0],
                    [0.0, 0.0, 0.0, 1.0]], jnp.float32)
    K = jnp.tile(K1[None], (B, 1, 1))
    inv_K = jnp.linalg.inv(K)

    T = jnp.tile(jnp.eye(4, dtype=jnp.float32)[None], (B, 1, 1))
    T = T.at[:, :3, 3].set(0.05 * jax.random.normal(k1, (B, 3), jnp.float32))
    T = T.at[:, :3, :3].add(0.01 * jax.random.normal(k2, (B, 3, 3), jnp.float32))

    depth = 1.0 + 9.0 * jax.random.uniform(k3, (B, 1, H, W), jnp.float32)
    img = jax.random.normal(k4, (B, C, H, W), jnp.float32)

    projecter = DepthProjecter((H, W))
    warped, mask = projecter(depth, inv_K, T, K, img, is_mask=True)
    warped = jax.block_until_ready(warped)
    mask = jax.block_until_ready(mask)

    ref_warped, ref_mask = _reference(projecter.pix_coords, depth, inv_K, T, K,
                                      img, H, W)
    assert warped.shape == (B, C, H, W) and mask.shape == (B, 1, H, W)
    np.testing.assert_allclose(np.asarray(warped), np.asarray(ref_warped),
                               rtol=1e-3, atol=1e-3)
    # The mask is a hard threshold of the projected coords; the folded camera
    # math can reassociate fp rounding for pixels sitting exactly on the
    # border, so allow a (tiny) fraction of boundary disagreements.
    mismatch = float(np.mean(np.asarray(mask) != np.asarray(ref_mask)))
    assert mismatch < 0.01, f"mask mismatch fraction {mismatch}"
    print("KERNEL_OK")
</pallas_src>

<mosaic_0001>
module attributes {stable_mosaic.version = 11 : i64} {
  func.func @_depth_projecter_kernel(%arg0: i32, %arg1: i32, %arg2: memref<2x12xf32, #tpu.memory_space<smem>>, %arg3: memref<2x256xf32, #tpu.memory_space<vmem>>, %arg4: memref<1x1x256xf32, #tpu.memory_space<vmem>>, %arg5: memref<1x64x16xf32, #tpu.memory_space<vmem>>, %arg6: memref<1x4x256xf32, #tpu.memory_space<vmem>>, %arg7: memref<1x1x256xf32, #tpu.memory_space<vmem>>) attributes {dimension_semantics = [#tpu.dimension_semantics<parallel>, #tpu.dimension_semantics<parallel>], iteration_bounds = array<i64: 2, 1>, scalar_prefetch = 0 : i64, scratch_operands = 0 : i64, tpu.core_type = #tpu.core_type<tc>, window_params = [{transform_indices = @transform_0, window_bounds = array<i64: 2, 12>}, {transform_indices = @transform_1, window_bounds = array<i64: 2, 256>}, {transform_indices = @transform_2, window_bounds = array<i64: 1, 1, 256>}, {transform_indices = @transform_3, window_bounds = array<i64: 1, 64, 16>}, {transform_indices = @transform_4, window_bounds = array<i64: 1, 4, 256>}, {transform_indices = @transform_5, window_bounds = array<i64: 1, 1, 256>}]} {
    %c0 = arith.constant 0 : index
    %c0_0 = arith.constant 0 : index
    %0 = vector.load %arg3[%c0, %c0_0] : memref<2x256xf32, #tpu.memory_space<vmem>>, vector<1x256xf32>
    %c1 = arith.constant 1 : index
    %c0_1 = arith.constant 0 : index
    %1 = vector.load %arg3[%c1, %c0_1] : memref<2x256xf32, #tpu.memory_space<vmem>>, vector<1x256xf32>
    %c0_2 = arith.constant 0 : index
    %c0_3 = arith.constant 0 : index
    %c0_4 = arith.constant 0 : index
    %2 = vector.load %arg4[%c0_2, %c0_3, %c0_4] : memref<1x1x256xf32, #tpu.memory_space<vmem>>, vector<1x1x256xf32>
    %3 = vector.shape_cast %2 : vector<1x1x256xf32> to vector<1x256xf32>
    %4 = arith.index_cast %arg0 : i32 to index
    %c0_5 = arith.constant 0 : index
    %5 = memref.load %arg2[%4, %c0_5] : memref<2x12xf32, #tpu.memory_space<smem>>
    %6 = vector.broadcast %5 : f32 to vector<1x256xf32>
    %7 = arith.mulf %6, %0 : vector<1x256xf32>
    %8 = arith.index_cast %arg0 : i32 to index
    %c1_6 = arith.constant 1 : index
    %9 = memref.load %arg2[%8, %c1_6] : memref<2x12xf32, #tpu.memory_space<smem>>
    %10 = vector.broadcast %9 : f32 to vector<1x256xf32>
    %11 = arith.mulf %10, %1 : vector<1x256xf32>
    %12 = arith.addf %7, %11 : vector<1x256xf32>
    %13 = arith.index_cast %arg0 : i32 to index
    %c2 = arith.constant 2 : index
    %14 = memref.load %arg2[%13, %c2] : memref<2x12xf32, #tpu.memory_space<smem>>
    %15 = vector.broadcast %14 : f32 to vector<1x256xf32>
    %16 = arith.addf %12, %15 : vector<1x256xf32>
    %17 = arith.mulf %3, %16 : vector<1x256xf32>
    %18 = arith.index_cast %arg0 : i32 to index
    %c9 = arith.constant 9 : index
    %19 = memref.load %arg2[%18, %c9] : memref<2x12xf32, #tpu.memory_space<smem>>
    %20 = vector.broadcast %19 : f32 to vector<1x256xf32>
    %21 = arith.addf %17, %20 : vector<1x256xf32>
    %22 = arith.index_cast %arg0 : i32 to index
    %c3 = arith.constant 3 : index
    %23 = memref.load %arg2[%22, %c3] : memref<2x12xf32, #tpu.memory_space<smem>>
    %24 = vector.broadcast %23 : f32 to vector<1x256xf32>
    %25 = arith.mulf %24, %0 : vector<1x256xf32>
    %26 = arith.index_cast %arg0 : i32 to index
    %c4 = arith.constant 4 : index
    %27 = memref.load %arg2[%26, %c4] : memref<2x12xf32, #tpu.memory_space<smem>>
    %28 = vector.broadcast %27 : f32 to vector<1x256xf32>
    %29 = arith.mulf %28, %1 : vector<1x256xf32>
    %30 = arith.addf %25, %29 : vector<1x256xf32>
    %31 = arith.index_cast %arg0 : i32 to index
    %c5 = arith.constant 5 : index
    %32 = memref.load %arg2[%31, %c5] : memref<2x12xf32, #tpu.memory_space<smem>>
    %33 = vector.broadcast %32 : f32 to vector<1x256xf32>
    %34 = arith.addf %30, %33 : vector<1x256xf32>
    %35 = arith.mulf %3, %34 : vector<1x256xf32>
    %36 = arith.index_cast %arg0 : i32 to index
    %c10 = arith.constant 10 : index
    %37 = memref.load %arg2[%36, %c10] : memref<2x12xf32, #tpu.memory_space<smem>>
    %38 = vector.broadcast %37 : f32 to vector<1x256xf32>
    %39 = arith.addf %35, %38 : vector<1x256xf32>
    %40 = arith.index_cast %arg0 : i32 to index
    %c6 = arith.constant 6 : index
    %41 = memref.load %arg2[%40, %c6] : memref<2x12xf32, #tpu.memory_space<smem>>
    %42 = vector.broadcast %41 : f32 to vector<1x256xf32>
    %43 = arith.mulf %42, %0 : vector<1x256xf32>
    %44 = arith.index_cast %arg0 : i32 to index
    %c7 = arith.constant 7 : index
    %45 = memref.load %arg2[%44, %c7] : memref<2x12xf32, #tpu.memory_space<smem>>
    %46 = vector.broadcast %45 : f32 to vector<1x256xf32>
    %47 = arith.mulf %46, %1 : vector<1x256xf32>
    %48 = arith.addf %43, %47 : vector<1x256xf32>
    %49 = arith.index_cast %arg0 : i32 to index
    %c8 = arith.constant 8 : index
    %50 = memref.load %arg2[%49, %c8] : memref<2x12xf32, #tpu.memory_space<smem>>
    %51 = vector.broadcast %50 : f32 to vector<1x256xf32>
    %52 = arith.addf %48, %51 : vector<1x256xf32>
    %53 = arith.mulf %3, %52 : vector<1x256xf32>
    %54 = arith.index_cast %arg0 : i32 to index
    %c11 = arith.constant 11 : index
    %55 = memref.load %arg2[%54, %c11] : memref<2x12xf32, #tpu.memory_space<smem>>
    %56 = vector.broadcast %55 : f32 to vector<1x256xf32>
    %57 = arith.addf %53, %56 : vector<1x256xf32>
    %cst = arith.constant 9.99999993E-9 : f32
    %58 = vector.broadcast %cst : f32 to vector<1x256xf32>
    %59 = arith.addf %57, %58 : vector<1x256xf32>
    %cst_7 = arith.constant 1.000000e+00 : f32
    %60 = vector.broadcast %cst_7 : f32 to vector<1x256xf32>
    %61 = arith.divf %60, %59 : vector<1x256xf32>
    %62 = arith.mulf %21, %61 : vector<1x256xf32>
    %63 = arith.mulf %39, %61 : vector<1x256xf32>
    %cst_8 = arith.constant 0.000000e+00 : f32
    %cst_9 = arith.constant 1.500000e+01 : f32
    %64 = vector.broadcast %cst_8 : f32 to vector<1x256xf32>
    %65 = arith.maximumf %64, %62 : vector<1x256xf32>
    %66 = vector.broadcast %cst_9 : f32 to vector<1x256xf32>
    %67 = arith.minimumf %66, %65 : vector<1x256xf32>
    %cst_10 = arith.constant 0.000000e+00 : f32
    %cst_11 = arith.constant 1.500000e+01 : f32
    %68 = vector.broadcast %cst_10 : f32 to vector<1x256xf32>
    %69 = arith.maximumf %68, %63 : vector<1x256xf32>
    %70 = vector.broadcast %cst_11 : f32 to vector<1x256xf32>
    %71 = arith.minimumf %70, %69 : vector<1x256xf32>
    %72 = math.floor %67 : vector<1x256xf32>
    %73 = math.floor %71 : vector<1x256xf32>
    %74 = arith.subf %67, %72 : vector<1x256xf32>
    %75 = arith.subf %71, %73 : vector<1x256xf32>
    %76 = arith.fptosi %72 : vector<1x256xf32> to vector<1x256xi32>
    %77 = arith.fptosi %73 : vector<1x256xf32> to vector<1x256xi32>
    %78 = tpu.iota {dimensions = array<i32: 0>} : vector<16x256xi32>
    %cst_12 = arith.constant 1.000000e+00 : f32
    %79 = vector.broadcast %cst_12 : f32 to vector<1x256xf32>
    %80 = arith.subf %79, %74 : vector<1x256xf32>
    %81 = vector.broadcast %76 : vector<1x256xi32> to vector<16x256xi32>
    %82 = arith.cmpi eq, %78, %81 : vector<16x256xi32>
    %83 = arith.extui %82 : vector<16x256xi1> to vector<16x256xi32>
    %84 = arith.sitofp %83 : vector<16x256xi32> to vector<16x256xf32>
    %85 = vector.broadcast %80 : vector<1x256xf32> to vector<16x256xf32>
    %86 = arith.mulf %85, %84 : vector<16x256xf32>
    %c1_i32 = arith.constant 1 : i32
    %87 = vector.broadcast %c1_i32 : i32 to vector<1x256xi32>
    %88 = arith.addi %76, %87 : vector<1x256xi32>
    %89 = vector.broadcast %88 : vector<1x256xi32> to vector<16x256xi32>
    %90 = arith.cmpi eq, %78, %89 : vector<16x256xi32>
    %91 = arith.extui %90 : vector<16x256xi1> to vector<16x256xi32>
    %92 = arith.sitofp %91 : vector<16x256xi32> to vector<16x256xf32>
    %93 = vector.broadcast %74 : vector<1x256xf32> to vector<16x256xf32>
    %94 = arith.mulf %93, %92 : vector<16x256xf32>
    %95 = arith.addf %86, %94 : vector<16x256xf32>
    %96 = tpu.iota {dimensions = array<i32: 0>} : vector<16x256xi32>
    %cst_13 = arith.constant 1.000000e+00 : f32
    %97 = vector.broadcast %cst_13 : f32 to vector<1x256xf32>
    %98 = arith.subf %97, %75 : vector<1x256xf32>
    %99 = vector.broadcast %77 : vector<1x256xi32> to vector<16x256xi32>
    %100 = arith.cmpi eq, %96, %99 : vector<16x256xi32>
    %101 = arith.extui %100 : vector<16x256xi1> to vector<16x256xi32>
    %102 = arith.sitofp %101 : vector<16x256xi32> to vector<16x256xf32>
    %103 = vector.broadcast %98 : vector<1x256xf32> to vector<16x256xf32>
    %104 = arith.mulf %103, %102 : vector<16x256xf32>
    %c1_i32_14 = arith.constant 1 : i32
    %105 = vector.broadcast %c1_i32_14 : i32 to vector<1x256xi32>
    %106 = arith.addi %77, %105 : vector<1x256xi32>
    %107 = vector.broadcast %106 : vector<1x256xi32> to vector<16x256xi32>
    %108 = arith.cmpi eq, %96, %107 : vector<16x256xi32>
    %109 = arith.extui %108 : vector<16x256xi1> to vector<16x256xi32>
    %110 = arith.sitofp %109 : vector<16x256xi32> to vector<16x256xf32>
    %111 = vector.broadcast %75 : vector<1x256xf32> to vector<16x256xf32>
    %112 = arith.mulf %111, %110 : vector<16x256xf32>
    %113 = arith.addf %104, %112 : vector<16x256xf32>
    %c0_15 = arith.constant 0 : index
    %c0_16 = arith.constant 0 : index
    %c0_17 = arith.constant 0 : index
    %114 = vector.load %arg5[%c0_15, %c0_16, %c0_17] : memref<1x64x16xf32, #tpu.memory_space<vmem>>, vector<1x64x16xf32>
    %115 = vector.shape_cast %114 : vector<1x64x16xf32> to vector<64x16xf32>
    %cst_18 = arith.constant dense<0.000000e+00> : vector<64x256xf32>
    %116 = tpu.matmul %115, %95, %cst_18 {dimension_numbers = #tpu.dot_dimension_numbers<[1], [0], [0], [1], [0, 0, 1, 1], [], []>, precision = #tpu.contract_precision<fp32>} : vector<64x16xf32>, vector<16x256xf32>, vector<64x256xf32> -> vector<64x256xf32>
    %117 = vector.extract_strided_slice %116 {offsets = [0, 0], sizes = [16, 256], strides = [1, 1]} : vector<64x256xf32> to vector<16x256xf32>
    %118 = arith.mulf %117, %113 : vector<16x256xf32>
    %cst_19 = arith.constant dense<0.000000e+00> : vector<256xf32>
    %119 = vector.multi_reduction <add>, %118, %cst_19 [0] : vector<16x256xf32> to vector<256xf32>
    %120 = vector.shape_cast %119 : vector<256xf32> to vector<1x256xf32>
    %121 = vector.extract_strided_slice %116 {offsets = [16, 0], sizes = [16, 256], strides = [1, 1]} : vector<64x256xf32> to vector<16x256xf32>
    %122 = arith.mulf %121, %113 : vector<16x256xf32>
    %cst_20 = arith.constant dense<0.000000e+00> : vector<256xf32>
    %123 = vector.multi_reduction <add>, %122, %cst_20 [0] : vector<16x256xf32> to vector<256xf32>
    %124 = vector.shape_cast %123 : vector<256xf32> to vector<1x256xf32>
    %125 = vector.extract_strided_slice %116 {offsets = [32, 0], sizes = [16, 256], strides = [1, 1]} : vector<64x256xf32> to vector<16x256xf32>
    %126 = arith.mulf %125, %113 : vector<16x256xf32>
    %cst_21 = arith.constant dense<0.000000e+00> : vector<256xf32>
    %127 = vector.multi_reduction <add>, %126, %cst_21 [0] : vector<16x256xf32> to vector<256xf32>
    %128 = vector.shape_cast %127 : vector<256xf32> to vector<1x256xf32>
    %129 = vector.extract_strided_slice %116 {offsets = [48, 0], sizes = [16, 256], strides = [1, 1]} : vector<64x256xf32> to vector<16x256xf32>
    %130 = arith.mulf %129, %113 : vector<16x256xf32>
    %cst_22 = arith.constant dense<0.000000e+00> : vector<256xf32>
    %131 = vector.multi_reduction <add>, %130, %cst_22 [0] : vector<16x256xf32> to vector<256xf32>
    %132 = vector.shape_cast %131 : vector<256xf32> to vector<1x256xf32>
    %133 = tpu.concatenate %120, %124, %128, %132 in 0 : vector<1x256xf32>, vector<1x256xf32>, vector<1x256xf32>, vector<1x256xf32> -> vector<4x256xf32>
    %c0_23 = arith.constant 0 : index
    %c0_24 = arith.constant 0 : index
    %c0_25 = arith.constant 0 : index
    %134 = vector.load %arg6[%c0_23, %c0_24, %c0_25] : memref<1x4x256xf32, #tpu.memory_space<vmem>>, vector<1x4x256xf32>
    %135 = vector.shape_cast %134 : vector<1x4x256xf32> to vector<4x256xf32>
    %136 = vector.shape_cast %133 : vector<4x256xf32> to vector<1x4x256xf32>
    tpu.vector_store %arg6[%c0_23, %c0_24, %c0_25], %136 {strides = array<i32>} : memref<1x4x256xf32, #tpu.memory_space<vmem>>, vector<1x4x256xf32>,
    %cst_26 = arith.constant 0.000000e+00 : f32
    %137 = vector.broadcast %cst_26 : f32 to vector<1x256xf32>
    %138 = arith.cmpf oge, %62, %137 : vector<1x256xf32>
    %cst_27 = arith.constant 1.500000e+01 : f32
    %139 = vector.broadcast %cst_27 : f32 to vector<1x256xf32>
    %140 = arith.cmpf ole, %62, %139 : vector<1x256xf32>
    %141 = arith.andi %138, %140 : vector<1x256xi1>
    %cst_28 = arith.constant 0.000000e+00 : f32
    %142 = vector.broadcast %cst_28 : f32 to vector<1x256xf32>
    %143 = arith.cmpf oge, %63, %142 : vector<1x256xf32>
    %cst_29 = arith.constant 1.500000e+01 : f32
    %144 = vector.broadcast %cst_29 : f32 to vector<1x256xf32>
    %145 = arith.cmpf ole, %63, %144 : vector<1x256xf32>
    %146 = arith.andi %143, %145 : vector<1x256xi1>
    %147 = arith.andi %141, %146 : vector<1x256xi1>
    %148 = arith.extui %147 : vector<1x256xi1> to vector<1x256xi32>
    %149 = arith.sitofp %148 : vector<1x256xi32> to vector<1x256xf32>
    %c0_30 = arith.constant 0 : index
    %c0_31 = arith.constant 0 : index
    %c0_32 = arith.constant 0 : index
    %150 = vector.load %arg7[%c0_30, %c0_31, %c0_32] : memref<1x1x256xf32, #tpu.memory_space<vmem>>, vector<1x1x256xf32>
    %151 = vector.shape_cast %150 : vector<1x1x256xf32> to vector<1x256xf32>
    %152 = vector.shape_cast %149 : vector<1x256xf32> to vector<1x1x256xf32>
    tpu.vector_store %arg7[%c0_30, %c0_31, %c0_32], %152 {strides = array<i32>} : memref<1x1x256xf32, #tpu.memory_space<vmem>>, vector<1x1x256xf32>,
    return
  }
  func.func @transform_0(%arg0: i32, %arg1: i32) -> (i32, i32) {
    %c0_i32 = arith.constant 0 : i32
    %c0_i32_0 = arith.constant 0 : i32
    %c0_i32_1 = arith.constant 0 : i32
    return %c0_i32, %c0_i32_0 : i32, i32
  }
  func.func @transform_1(%arg0: i32, %arg1: i32) -> (i32, i32) {
    %c0_i32 = arith.constant 0 : i32
    %c0_i32_0 = arith.constant 0 : i32
    return %c0_i32, %arg1 : i32, i32
  }
  func.func @transform_2(%arg0: i32, %arg1: i32) -> (i32, i32, i32) {
    %c0_i32 = arith.constant 0 : i32
    %c0_i32_0 = arith.constant 0 : i32
    return %arg0, %c0_i32, %arg1 : i32, i32, i32
  }
  func.func @transform_3(%arg0: i32, %arg1: i32) -> (i32, i32, i32) {
    %c0_i32 = arith.constant 0 : i32
    %c0_i32_0 = arith.constant 0 : i32
    %c0_i32_1 = arith.constant 0 : i32
    return %arg0, %c0_i32, %c0_i32_0 : i32, i32, i32
  }
  func.func @transform_4(%arg0: i32, %arg1: i32) -> (i32, i32, i32) {
    %c0_i32 = arith.constant 0 : i32
    %c0_i32_0 = arith.constant 0 : i32
    return %arg0, %c0_i32, %arg1 : i32, i32, i32
  }
  func.func @transform_5(%arg0: i32, %arg1: i32) -> (i32, i32, i32) {
    %c0_i32 = arith.constant 0 : i32
    %c0_i32_0 = arith.constant 0 : i32
    return %arg0, %c0_i32, %arg1 : i32, i32, i32
  }
}

</mosaic_0001>

<llo_original>
// kernel: tpu_custom_call.1
$region0: #{tpu_custom_call.1}
  #allocation0 [shape = 'u32[]', space=smem, size = 0x4, offset = 0x4, fixed_abs, tag = 'smem constant byte address 0x4 - core index']
  #allocation1 [shape = 'u32[144,128]{1,0:T(1,128)}', space=vmem, size = 0x12000, scoped, tag = 'internal scratch']
  %s0 = inlined_call_operand.vmem [shape: f32[2,12], index: 0, kind: input, shape index: {}]
  %s1 = inlined_call_operand.vmem [shape: f32[2,256], index: 1, kind: input, shape index: {}]
  %s2 = inlined_call_operand.vmem [shape: f32[2,1,256], index: 2, kind: input, shape index: {}]
  %s3 = inlined_call_operand.vmem [shape: f32[2,64,16], index: 3, kind: input, shape index: {}]
  %s4 = inlined_call_operand.hbm [shape: f32[2,4,256], index: 4, kind: output, shape index: {0}]
  %s5 = inlined_call_operand.hbm [shape: f32[2,1,256], index: 5, kind: output, shape index: {1}]
  %6 = xla_tuple %s4, %s5
  %s7 = sld [smem:[#allocation0]]
  $region61: #{tpu_custom_call.1} parent=0
    _
  %s9 = ssub.s32 1, %s7
  %s10 = scalar_select 0, %s9, %s7
  $region1: #{tpu_custom_call.1} parent=0
    #allocation2 [shape = 'u8[1024]{0}', space=smem, size = 0x400, scoped, tag = 'input window, operand 0, single buffered']
    #allocation3 [shape = 's32[2]{0}', space=sflag, size = 0x8, scoped, tag = 'scoped memory for tpu_custom_call.1']
    #allocation4 [shape = 's32[2]{0}', space=sflag, size = 0x8, scoped, tag = 'scoped memory for tpu_custom_call.1']
    #allocation5 [shape = 'u8[8192]{0}', space=vmem, size = 0x2000, scoped, tag = 'output window, operand 0']
    #allocation6 [shape = 'u8[2048]{0}', space=vmem, size = 0x800, scoped, tag = 'output window, operand 1']
    #allocation7 [shape = 's32[2]{0}', space=sflag, size = 0x8, scoped, tag = 'scoped memory for tpu_custom_call.1']
    %11 = vsyncpa [#allocation4], 0
    %12 = vsyncpa [#allocation3], 0
    %s13 = scalar_lea.sflag [#allocation3], 1
    %14 = vsyncpa %s13, 0
    %15 = vsyncpa [#allocation7], 0
    %s16 = scalar_lea.sflag [#allocation7], 1
    %17 = vsyncpa %s16, 0
    loop: start=0, step=1, limit=4
    $region2: #{tpu_custom_call.1} parent=1 // loop_pre_header
      _
    $region3: #{tpu_custom_call.1} parent=1 // loop_header
      %s19 = sphi 0, %s23
      %p20 = scmp.ge.s32.totalorder %s19, 4
      %s26 = sphi 0, %s38
      %s27 = sphi 0, %s34
      %s28 = sphi 0, %s26
      %s29 = sphi 0, %s27
      %s30 = sphi 0, %s28
      %s31 = sphi 0, %s29
      %s39 = sphi 0, %s39
      %s41 = sphi 0, %s39
      %s42 = sphi 0, %s41
      %s56 = sphi 0, %s42
      %s62 = sphi 0, %s64
      %s65 = sphi 0, %s62
      %s66 = sphi 0, %s65
      %s82 = sphi 0, %s66
      %s90 = sphi 0, %s92
      %s93 = sphi 0, %s90
      %s94 = sphi 0, %s93
      %s110 = sphi 0, %s94
      %s116 = sphi 0, %s118
      %s119 = sphi 0, %s116
      %s120 = sphi 0, %s119
      %s136 = sphi 0, %s120
      %s144 = sphi 0, %s146
      %s147 = sphi 0, %s144
      %s148 = sphi 0, %s147
      %s164 = sphi 0, %s148
      %s172 = sphi 0, %s174
      %s175 = sphi 0, %s172
      %s176 = sphi 0, %s175
      %s192 = sphi 0, %s176
    $region4: #{tpu_custom_call.1} parent=1 // loop_header_branch
      %22 = sbr.rel (%p20) target = $region8
    $region5: #{tpu_custom_call.1} parent=1 // loop_body
      %s24 = ssub.s32 %s19, 1
      %s25 = ssub.s32 %s19, 2
      %s32 = sadd.s32 1, %s27
      %p33 = scmp.ge.s32.totalorder %s32, 1
      %s34 = scalar_select %p33, 0, %s32
      %s35 = sadd.s32 1, %s26
      %s36 = scalar_select %p33, %s35, %s26
      %p37 = scmp.ge.s32.totalorder %s36, 2
      %s38 = scalar_select %p37, 0, %s36
      %s40 = sadd.s32 %s39, 1
      %p43 = scmp.eq.s32.totalorder %s19, 1
      %p44 = scmp.ne.s32.totalorder %s39, %s41
      %p45 = scmp.eq.s32.totalorder %s19, 0
      %p46 = por %p44, %p45
      %p47 = scmp.ne.s32.totalorder %s39, %s41
      %p48 = scmp.eq.s32.totalorder %s24, 1
      %p49 = por %p47, %p48
      %p50 = scmp.ne.s32.totalorder %s41, %s42
      %p51 = scmp.eq.s32.totalorder %s24, 0
      %p52 = por %p50, %p51
      %p53 = scmp.ne.s32.totalorder %s41, %s42
      %p54 = scmp.eq.s32.totalorder %s25, 1
      %p55 = por %p53, %p54
      %p57 = scmp.ne.s32.totalorder %s42, %s56
      %p58 = scmp.eq.s32.totalorder %s25, 0
      %p59 = por %p57, %p58
      %s60 = ssub.s32 %s27, %s34
      %p61 = scmp.eq.s32.totalorder %s60, 0
      %s63 = sadd.s32 %s62, 1
      %s64 = scalar_select %p61, %s62, %s63
      %p67 = pneg %p61
      %p68 = scmp.eq.s32.totalorder %s19, 1
      %p69 = por %p67, %p68
      %p70 = scmp.ne.s32.totalorder %s62, %s65
      %p71 = scmp.eq.s32.totalorder %s19, 0
      %p72 = por %p70, %p71
      %p73 = scmp.ne.s32.totalorder %s62, %s65
      %p74 = scmp.eq.s32.totalorder %s24, 1
      %p75 = por %p73, %p74
      %p76 = scmp.ne.s32.totalorder %s65, %s66
      %p77 = scmp.eq.s32.totalorder %s24, 0
      %p78 = por %p76, %p77
      %p79 = scmp.ne.s32.totalorder %s65, %s66
      %p80 = scmp.eq.s32.totalorder %s25, 1
      %p81 = por %p79, %p80
      %p83 = scmp.ne.s32.totalorder %s66, %s82
      %p84 = scmp.eq.s32.totalorder %s25, 0
      %p85 = por %p83, %p84
      %s86 = ssub.s32 %s26, %s38
      %s87 = ssub.s32 %s27, %s34
      %s88 = sor.u32 %s86, %s87
      %p89 = scmp.eq.s32.totalorder %s88, 0
      %s91 = sadd.s32 %s90, 1
      %s92 = scalar_select %p89, %s90, %s91
      %p95 = pneg %p89
      %p96 = scmp.eq.s32.totalorder %s19, 1
      %p97 = por %p95, %p96
      %p98 = scmp.ne.s32.totalorder %s90, %s93
      %p99 = scmp.eq.s32.totalorder %s19, 0
      %p100 = por %p98, %p99
      %p101 = scmp.ne.s32.totalorder %s90, %s93
      %p102 = scmp.eq.s32.totalorder %s24, 1
      %p103 = por %p101, %p102
      %p104 = scmp.ne.s32.totalorder %s93, %s94
      %p105 = scmp.eq.s32.totalorder %s24, 0
      %p106 = por %p104, %p105
      %p107 = scmp.ne.s32.totalorder %s93, %s94
      %p108 = scmp.eq.s32.totalorder %s25, 1
      %p109 = por %p107, %p108
      %p111 = scmp.ne.s32.totalorder %s94, %s110
      %p112 = scmp.eq.s32.totalorder %s25, 0
      %p113 = por %p111, %p112
      %s114 = ssub.s32 %s26, %s38
      %p115 = scmp.eq.s32.totalorder %s114, 0
      %s117 = sadd.s32 %s116, 1
      %s118 = scalar_select %p115, %s116, %s117
      %p121 = pneg %p115
      %p122 = scmp.eq.s32.totalorder %s19, 1
      %p123 = por %p121, %p122
      %p124 = scmp.ne.s32.totalorder %s116, %s119
      %p125 = scmp.eq.s32.totalorder %s19, 0
      %p126 = por %p124, %p125
      %p127 = scmp.ne.s32.totalorder %s116, %s119
      %p128 = scmp.eq.s32.totalorder %s24, 1
      %p129 = por %p127, %p128
      %p130 = scmp.ne.s32.totalorder %s119, %s120
      %p131 = scmp.eq.s32.totalorder %s24, 0
      %p132 = por %p130, %p131
      %p133 = scmp.ne.s32.totalorder %s119, %s120
      %p134 = scmp.eq.s32.totalorder %s25, 1
      %p135 = por %p133, %p134
      %p137 = scmp.ne.s32.totalorder %s120, %s136
      %p138 = scmp.eq.s32.totalorder %s25, 0
      %p139 = por %p137, %p138
      %s140 = ssub.s32 %s26, %s38
      %s141 = ssub.s32 %s27, %s34
      %s142 = sor.u32 %s140, %s141
      %p143 = scmp.eq.s32.totalorder %s142, 0
      %s145 = sadd.s32 %s144, 1
      %s146 = scalar_select %p143, %s144, %s145
      %p149 = pneg %p143
      %p150 = scmp.eq.s32.totalorder %s19, 1
      %p151 = por %p149, %p150
      %p152 = scmp.ne.s32.totalorder %s144, %s147
      %p153 = scmp.eq.s32.totalorder %s19, 0
      %p154 = por %p152, %p153
      %p155 = scmp.ne.s32.totalorder %s144, %s147
      %p156 = scmp.eq.s32.totalorder %s24, 1
      %p157 = por %p155, %p156
      %p158 = scmp.ne.s32.totalorder %s147, %s148
      %p159 = scmp.eq.s32.totalorder %s24, 0
      %p160 = por %p158, %p159
      %p161 = scmp.ne.s32.totalorder %s147, %s148
      %p162 = scmp.eq.s32.totalorder %s25, 1
      %p163 = por %p161, %p162
      %p165 = scmp.ne.s32.totalorder %s148, %s164
      %p166 = scmp.eq.s32.totalorder %s25, 0
      %p167 = por %p165, %p166
      %s168 = ssub.s32 %s26, %s38
      %s169 = ssub.s32 %s27, %s34
      %s170 = sor.u32 %s168, %s169
      %p171 = scmp.eq.s32.totalorder %s170, 0
      %s173 = sadd.s32 %s172, 1
      %s174 = scalar_select %p171, %s172, %s173
      %p177 = pneg %p171
      %p178 = scmp.eq.s32.totalorder %s19, 1
      %p179 = por %p177, %p178
      %p180 = scmp.ne.s32.totalorder %s172, %s175
      %p181 = scmp.eq.s32.totalorder %s19, 0
      %p182 = por %p180, %p181
      %p183 = scmp.ne.s32.totalorder %s172, %s175
      %p184 = scmp.eq.s32.totalorder %s24, 1
      %p185 = por %p183, %p184
      %p186 = scmp.ne.s32.totalorder %s175, %s176
      %p187 = scmp.eq.s32.totalorder %s24, 0
      %p188 = por %p186, %p187
      %p189 = scmp.ne.s32.totalorder %s175, %s176
      %p190 = scmp.eq.s32.totalorder %s25, 1
      %p191 = por %p189, %p190
      %p193 = scmp.ne.s32.totalorder %s176, %s192
      %p194 = scmp.eq.s32.totalorder %s25, 0
      %p195 = por %p193, %p194
      %p196 = scmp.le.s32.totalorder 1, %s19
      %p197 = scmp.lt.s32.totalorder %s19, 3
      %p198 = pnand %p196, %p197
      %p199 = pneg %p198
      // Predicated region
      $region9: #{tpu_custom_call.1} parent=5 // pred_check
        _
      $region10: #{tpu_custom_call.1} parent=5 // pred_check_branch
        %201 = sbr.rel (%p198) target = $region12
      $region11: #{tpu_custom_call.1} parent=5 // pred_region
        %s202 = ssub.s32 %s19, 1
        // Predicated region
        $region13: #{tpu_custom_call.1} parent=11 // pred_check
          %p203 = pneg %p52
        $region14: #{tpu_custom_call.1} parent=11 // pred_check_branch
          %205 = sbr.rel (%p203) target = $region16
        $region15: #{tpu_custom_call.1} parent=11 // pred_region
          %s207 = ssub.s32 32, 32
          %208 = vsyncadd [#allocation4], %s207
          %s210 = sshll.u32 %s0, 4
          %s211 = int_to_ptr.vmem [resolvable:$true] %s210
          %213 = dma.vmem_to_smem %s211, 32, [#allocation2], [#allocation4]
        $region16: #{tpu_custom_call.1} parent=11 // pred_fallthru
          _
        // Predicated region
        $region17: #{tpu_custom_call.1} parent=11 // pred_check
          %p214 = pneg %p78
        $region18: #{tpu_custom_call.1} parent=11 // pred_check_branch
          %216 = sbr.rel (%p214) target = $region20
        $region19: #{tpu_custom_call.1} parent=11 // pred_region
          %s217 = smul.u32 2, %s29
          %p218 = scmp.lt.s32.totalorder %s217, 1
          %s219 = scalar_select %p218, %s217, 1
          %s220 = smul.addr %s219, 2
          %s221 = scalar_lea.vmem %s1, %s220
          %s222 = smul.u32 2, %s29
        $region20: #{tpu_custom_call.1} parent=11 // pred_fallthru
          _
      $region12: #{tpu_custom_call.1} parent=5 // pred_fallthru
        _
      %p223 = scmp.lt.s32.totalorder %s19, 2
      // Predicated region
      $region21: #{tpu_custom_call.1} parent=5 // pred_check
        %p224 = pneg %p223
      $region22: #{tpu_custom_call.1} parent=5 // pred_check_branch
        %226 = sbr.rel (%p224) target = $region24
      $region23: #{tpu_custom_call.1} parent=5 // pred_region
        // Predicated region
        $region25: #{tpu_custom_call.1} parent=23 // pred_check
          %p227 = pneg %p100
        $region26: #{tpu_custom_call.1} parent=23 // pred_check_branch
          %229 = sbr.rel (%p227) target = $region28
        $region27: #{tpu_custom_call.1} parent=23 // pred_region
          %s230 = smul.u32 2, %s27
          %p231 = scmp.lt.s32.totalorder %s26, 1
          %s232 = scalar_select %p231, %s26, 1
          %p233 = scmp.lt.s32.totalorder %s230, 1
          %s234 = scalar_select %p233, %s230, 1
          %s235 = smul.addr %s232, 2
          %s236 = sadd.s32 %s234, %s235
          %s237 = scalar_lea.vmem %s2, %s236
          %s238 = smul.u32 2, %s27
        $region28: #{tpu_custom_call.1} parent=23 // pred_fallthru
          _
        // Predicated region
        $region29: #{tpu_custom_call.1} parent=23 // pred_check
          %p239 = pneg %p126
        $region30: #{tpu_custom_call.1} parent=23 // pred_check_branch
          %241 = sbr.rel (%p239) target = $region32
        $region31: #{tpu_custom_call.1} parent=23 // pred_region
          %p242 = scmp.lt.s32.totalorder %s26, 1
          %s243 = scalar_select %p242, %s26, 1
          %s244 = smul.addr %s243, 8
          %s245 = smul.addr %s244, 8
          %s246 = scalar_lea.vmem %s3, %s245
        $region32: #{tpu_custom_call.1} parent=23 // pred_fallthru
          _
      $region24: #{tpu_custom_call.1} parent=5 // pred_fallthru
        _
      %p247 = scmp.le.s32.totalorder 1, %s19
      %p248 = scmp.lt.s32.totalorder %s19, 3
      %p249 = pnand %p247, %p248
      %p250 = pneg %p249
      // Predicated region
      $region33: #{tpu_custom_call.1} parent=5 // pred_check
        _
      $region34: #{tpu_custom_call.1} parent=5 // pred_check_branch
        %252 = sbr.rel (%p249) target = $region36
      $region35: #{tpu_custom_call.1} parent=5 // pred_region
        %s253 = ssub.s32 %s19, 1
        // Predicated region
        $region37: #{tpu_custom_call.1} parent=35 // pred_check
          %p254 = pneg %p52
        $region38: #{tpu_custom_call.1} parent=35 // pred_check_branch
          %256 = sbr.rel (%p254) target = $region40
        $region39: #{tpu_custom_call.1} parent=35 // pred_region
          %257 = dma.done [#allocation4], 32
        $region40: #{tpu_custom_call.1} parent=35 // pred_fallthru
          _
        %258 = sfence
        %p259 = pneg %p52
        %p260 = pneg %p49
        %s261 = smul.u32 2, %s29
        %p262 = scmp.lt.s32.totalorder %s261, 1
        %s263 = scalar_select %p262, %s261, 1
        %s264 = smul.addr %s263, 2
        %s265 = scalar_lea.vmem %s1, %s264
        %p266 = pneg %p78
        %p267 = pneg %p75
        %s268 = smul.u32 2, %s29
        %p269 = scmp.lt.s32.totalorder %s28, 1
        %s270 = scalar_select %p269, %s28, 1
        %p271 = scmp.lt.s32.totalorder %s268, 1
        %s272 = scalar_select %p271, %s268, 1
        %s273 = smul.addr %s270, 2
        %s274 = sadd.s32 %s272, %s273
        %s275 = scalar_lea.vmem %s2, %s274
        %p276 = pneg %p106
        %p277 = pneg %p103
        %p278 = scmp.lt.s32.totalorder %s28, 1
        %s279 = scalar_select %p278, %s28, 1
        %s280 = smul.addr %s279, 8
        %s281 = smul.addr %s280, 8
        %s282 = scalar_lea.vmem %s3, %s281
        %p283 = pneg %p132
        %p284 = pneg %p129
        %p285 = pneg %p160
        %p286 = pneg %p157
        %s287 = sand.u32 %s147, 1
        %s288 = scalar_lea.sflag [#allocation3], %s287
        %s289 = sand.u32 %s147, 1
        %s290 = smul.addr %s289, 8
        %s291 = scalar_lea.vmem [#allocation5], %s290
        %p292 = pneg %p188
        %p293 = pneg %p185
        %s294 = sand.u32 %s175, 1
        %s295 = scalar_lea.sflag [#allocation7], %s294
        %s296 = sand.u32 %s175, 1
        %s297 = smul.addr %s296, 2
        %s298 = scalar_lea.vmem [#allocation6], %s297
        %s299 = smul.u32 2, %s29
        %p300 = scmp.lt.s32.totalorder %s299, 1
        %s301 = scalar_select %p300, %s299, 1
        %s302 = smul.addr %s301, 2
        %s303 = scalar_lea.vmem %s1, %s302
        %s304 = smul.u32 2, %s29
        %s305 = smul.u32 2, %s29
        %p306 = scmp.lt.s32.totalorder %s28, 1
        %s307 = scalar_select %p306, %s28, 1
        %p308 = scmp.lt.s32.totalorder %s305, 1
        %s309 = scalar_select %p308, %s305, 1
        %s310 = smul.addr %s307, 2
        %s311 = sadd.s32 %s309, %s310
        %s312 = scalar_lea.vmem %s2, %s311
        %s313 = smul.u32 2, %s29
        %p314 = scmp.lt.s32.totalorder %s28, 1
        %s315 = scalar_select %p314, %s28, 1
        %s316 = smul.addr %s315, 8
        %s317 = smul.addr %s316, 8
        %s318 = scalar_lea.vmem %s3, %s317
        %s319 = smul.u32 2, %s29
        %s320 = smul.u32 2, %s29
        %v321 = vld [vmem:[%s303] ss:$2 sm:$0x3]
        %s322 = scalar_lea.vmem %s303, 1
        %v323 = vld [vmem:[%s322] ss:$2 sm:$0x3]
        %v324 = vld [vmem:[%s312] sm:$0x3]
        %s325 = smul.u32 %s28, 128
        %s326 = sld [smem:[#allocation2 + %s325]]
        %v327 = vstv %s326
        %v328 = vmul.f32 %v327, %v321
        %s329 = sadd.s32 %s325, 1
        %s330 = sld [smem:[#allocation2 + %s329]]
        %v331 = vstv %s330
        %v332 = vmul.f32 %v331, %v323
        %v333 = vadd.f32 %v328, %v332
        %s334 = sadd.s32 %s325, 2
        %s335 = sld [smem:[#allocation2 + %s334]]
        %v336 = vstv %s335
        %v337 = vadd.f32 %v333, %v336
        %v338 = vmul.f32 %v324, %v337
        %s339 = sadd.s32 %s325, 9
        %s340 = sld [smem:[#allocation2 + %s339]]
        %v341 = vstv %s340
        %v342 = vadd.f32 %v338, %v341
        %s343 = sadd.s32 %s325, 3
        %s344 = sld [smem:[#allocation2 + %s343]]
        %v345 = vstv %s344
        %v346 = vmul.f32 %v345, %v321
        %s347 = sadd.s32 %s325, 4
        %s348 = sld [smem:[#allocation2 + %s347]]
        %v349 = vstv %s348
        %v350 = vmul.f32 %v349, %v323
        %v351 = vadd.f32 %v346, %v350
        %s352 = sadd.s32 %s325, 5
        %s353 = sld [smem:[#allocation2 + %s352]]
        %v354 = vstv %s353
        %v355 = vadd.f32 %v351, %v354
        %v356 = vmul.f32 %v324, %v355
        %s357 = sadd.s32 %s325, 10
        %s358 = sld [smem:[#allocation2 + %s357]]
        %v359 = vstv %s358
        %v360 = vadd.f32 %v356, %v359
        %s361 = sadd.s32 %s325, 6
        %s362 = sld [smem:[#allocation2 + %s361]]
        %v363 = vstv %s362
        %v364 = vmul.f32 %v363, %v321
        %s365 = sadd.s32 %s325, 7
        %s366 = sld [smem:[#allocation2 + %s365]]
        %v367 = vstv %s366
        %v368 = vmul.f32 %v367, %v323
        %v369 = vadd.f32 %v364, %v368
        %s370 = sadd.s32 %s325, 8
        %s371 = sld [smem:[#allocation2 + %s370]]
        %v372 = vstv %s371
        %v373 = vadd.f32 %v369, %v372
        %v374 = vmul.f32 %v324, %v373
        %s375 = sadd.s32 %s325, 11
        %s376 = sld [smem:[#allocation2 + %s375]]
        %v377 = vstv %s376
        %v378 = vadd.f32 %v374, %v377
        %v379 = vadd.f32 %v378, 1e-08
        %v380 = vrcp.pop %v379
        %v381 = vmul.f32 1.0, %v380
        %v382 = vmul.f32 %v342, %v381
        %v383 = vmul.f32 %v360, %v381
        %v384 = vmax.f32 %v382, 0.0
        %v385 = vmin.f32 %v384, 15.0
        %v386 = vmax.f32 %v383, 0.0
        %v387 = vmin.f32 %v386, 15.0
        %v388 = vfloor.f32 %v385
        %v389 = vfloor.f32 %v387
        %v390 = vsub.f32 %v385, %v388
        %v391 = vsub.f32 %v387, %v389
        %v392 = vcvt.f32.s32.to.zero.pseudo %v388
        %v393 = vcvt.f32.s32.to.zero.pseudo %v389
        %v394 = vlaneseq
        %v395 = vshrl.u32 %v394, 7
        %v396 = vadd.s32 %v395, 8
        %v397 = vsub.f32 1.0, %v390
        %v398 = vlaneseq
        %v399 = vshrl.u32 %v398, 7
        %v400 = vsub.s32 0, %v399
        %v401 = vrot.slane %v392, %v400
        %v402 = vlaneseq
        %v403 = vshrl.u32 %v402, 7
        %v404 = vsub.s32 1, %v403
        %v405 = vrot.slane %v392, %v404
        %vm406 = vcmp.eq.s32.totalorder %v395, %v401
        %vm407 = vcmp.eq.s32.totalorder %v395, %v405
        %vm408 = vcmp.eq.s32.totalorder %v396, %v401
        %vm409 = vcmp.eq.s32.totalorder %v396, %v405
        %v410 = vsel %vm406, 1, 0
        %v411 = vsel %vm407, 1, 0
        %v412 = vsel %vm408, 1, 0
        %v413 = vsel %vm409, 1, 0
        %v414 = vcvt.s32.f32 %v410
        %v415 = vcvt.s32.f32 %v411
        %v416 = vcvt.s32.f32 %v412
        %v417 = vcvt.s32.f32 %v413
        %v419 = vlaneseq
        %v420 = vshrl.u32 %v419, 7
        %v421 = vsub.s32 0, %v420
        %v422 = vrot.slane %v397, %v421
        %v423 = vlaneseq
        %v424 = vshrl.u32 %v423, 7
        %v425 = vsub.s32 1, %v424
        %v426 = vrot.slane %v397, %v425
        %v429 = vmul.f32 %v422, %v414
        %v430 = vmul.f32 %v426, %v415
        %v431 = vmul.f32 %v422, %v416
        %v432 = vmul.f32 %v426, %v417
        %v433 = vadd.s32 %v392, 1
        %v434 = vlaneseq
        %v435 = vshrl.u32 %v434, 7
        %v436 = vsub.s32 0, %v435
        %v437 = vrot.slane %v433, %v436
        %v438 = vlaneseq
        %v439 = vshrl.u32 %v438, 7
        %v440 = vsub.s32 1, %v439
        %v441 = vrot.slane %v433, %v440
        %vm442 = vcmp.eq.s32.totalorder %v395, %v437
        %vm443 = vcmp.eq.s32.totalorder %v395, %v441
        %vm444 = vcmp.eq.s32.totalorder %v396, %v437
        %vm445 = vcmp.eq.s32.totalorder %v396, %v441
        %v446 = vsel %vm442, 1, 0
        %v447 = vsel %vm443, 1, 0
        %v448 = vsel %vm444, 1, 0
        %v449 = vsel %vm445, 1, 0
        %v450 = vcvt.s32.f32 %v446
        %v451 = vcvt.s32.f32 %v447
        %v452 = vcvt.s32.f32 %v448
        %v453 = vcvt.s32.f32 %v449
        %v455 = vlaneseq
        %v456 = vshrl.u32 %v455, 7
        %v457 = vsub.s32 0, %v456
        %v458 = vrot.slane %v390, %v457
        %v459 = vlaneseq
        %v460 = vshrl.u32 %v459, 7
        %v461 = vsub.s32 1, %v460
        %v462 = vrot.slane %v390, %v461
        %v465 = vmul.f32 %v458, %v450
        %v466 = vmul.f32 %v462, %v451
        %v467 = vmul.f32 %v458, %v452
        %v468 = vmul.f32 %v462, %v453
        %v469 = vadd.f32 %v429, %v465
        %v470 = vadd.f32 %v430, %v466
        %v471 = vadd.f32 %v431, %v467
        %v472 = vadd.f32 %v432, %v468
        %v473 = vsub.f32 1.0, %v391
        %v474 = vlaneseq
        %v475 = vshrl.u32 %v474, 7
        %v476 = vsub.s32 0, %v475
        %v477 = vrot.slane %v393, %v476
        %v478 = vlaneseq
        %v479 = vshrl.u32 %v478, 7
        %v480 = vsub.s32 1, %v479
        %v481 = vrot.slane %v393, %v480
        %vm482 = vcmp.eq.s32.totalorder %v395, %v477
        %vm483 = vcmp.eq.s32.totalorder %v395, %v481
        %vm484 = vcmp.eq.s32.totalorder %v396, %v477
        %vm485 = vcmp.eq.s32.totalorder %v396, %v481
        %v486 = vsel %vm482, 1, 0
        %v487 = vsel %vm483, 1, 0
        %v488 = vsel %vm484, 1, 0
        %v489 = vsel %vm485, 1, 0
        %v490 = vcvt.s32.f32 %v486
        %v491 = vcvt.s32.f32 %v487
        %v492 = vcvt.s32.f32 %v488
        %v493 = vcvt.s32.f32 %v489
        %v495 = vlaneseq
        %v496 = vshrl.u32 %v495, 7
        %v497 = vsub.s32 0, %v496
        %v498 = vrot.slane %v473, %v497
        %v499 = vlaneseq
        %v500 = vshrl.u32 %v499, 7
        %v501 = vsub.s32 1, %v500
        %v502 = vrot.slane %v473, %v501
        %v505 = vmul.f32 %v498, %v490
        %v506 = vmul.f32 %v502, %v491
        %v507 = vmul.f32 %v498, %v492
        %v508 = vmul.f32 %v502, %v493
        %v509 = vadd.s32 %v393, 1
        %v510 = vlaneseq
        %v511 = vshrl.u32 %v510, 7
        %v512 = vsub.s32 0, %v511
        %v513 = vrot.slane %v509, %v512
        %v514 = vlaneseq
        %v515 = vshrl.u32 %v514, 7
        %v516 = vsub.s32 1, %v515
        %v517 = vrot.slane %v509, %v516
        %vm518 = vcmp.eq.s32.totalorder %v395, %v513
        %vm519 = vcmp.eq.s32.totalorder %v395, %v517
        %vm520 = vcmp.eq.s32.totalorder %v396, %v513
        %vm521 = vcmp.eq.s32.totalorder %v396, %v517
        %v522 = vsel %vm518, 1, 0
        %v523 = vsel %vm519, 1, 0
        %v524 = vsel %vm520, 1, 0
        %v525 = vsel %vm521, 1, 0
        %v526 = vcvt.s32.f32 %v522
        %v527 = vcvt.s32.f32 %v523
        %v528 = vcvt.s32.f32 %v524
        %v529 = vcvt.s32.f32 %v525
        %v531 = vlaneseq
        %v532 = vshrl.u32 %v531, 7
        %v533 = vsub.s32 0, %v532
        %v534 = vrot.slane %v391, %v533
        %v535 = vlaneseq
        %v536 = vshrl.u32 %v535, 7
        %v537 = vsub.s32 1, %v536
        %v538 = vrot.slane %v391, %v537
        %v541 = vmul.f32 %v534, %v526
        %v542 = vmul.f32 %v538, %v527
        %v543 = vmul.f32 %v534, %v528
        %v544 = vmul.f32 %v538, %v529
        %v545 = vadd.f32 %v505, %v541
        %v546 = vadd.f32 %v506, %v542
        %v547 = vadd.f32 %v507, %v543
        %v548 = vadd.f32 %v508, %v544
        %v549 = vld [vmem:[%s318] sm:$0xff]
        %v550 = vld [vmem:[%s318 + $0x8] sm:$0xff]
        %v551 = vld [vmem:[%s318 + $0x10] sm:$0xff]
        %v552 = vld [vmem:[%s318 + $0x18] sm:$0xff]
        %v553 = vld [vmem:[%s318 + $0x20] sm:$0xff]
        %v554 = vld [vmem:[%s318 + $0x28] sm:$0xff]
        %v555 = vld [vmem:[%s318 + $0x30] sm:$0xff]
        %v556 = vld [vmem:[%s318 + $0x38] sm:$0xff]
        %vm557 = vcmask 130048
        %v559 = vsel %vm557, %v549, 0
        %v562 = vsel %vm557, %v550, 0
        %v565 = vsel %vm557, %v551, 0
        %v568 = vsel %vm557, %v552, 0
        %v571 = vsel %vm557, %v553, 0
        %v574 = vsel %vm557, %v554, 0
        %v577 = vsel %vm557, %v555, 0
        %v580 = vsel %vm557, %v556, 0
        %v582 = vand.u32 %v470, 4294901760
        %583 = vmatprep.subr.mxu0 %v582
        %v584 = vand.u32 %v469, 4294901760
        %585 = vmatpush1.msra.mxu0 %v584
        %v586 = vand.u32 %v472, 4294901760
        %587 = vmatprep.subr.mxu0 %v586
        %v588 = vand.u32 %v471, 4294901760
        %589 = vmatpush1.msra.mxu0 %v588
        %590 = vmatprep.subr.mxu0 0.0
        %591 = vmatpush1.msra.mxu0 0.0
        %592 = vmatprep.subr.mxu0 0.0
        %593 = vmatpush1.msra.mxu0 0.0
        %594 = vmatprep.subr.mxu0 0.0
        %595 = vmatpush1.msra.mxu0 0.0
        %596 = vmatprep.subr.mxu0 0.0
        %597 = vmatpush1.msra.mxu0 0.0
        %598 = vmatprep.subr.mxu0 0.0
        %599 = vmatpush1.msra.mxu0 0.0
        %600 = vmatprep.subr.mxu0 0.0
        %601 = vmatpush1.msra.mxu0 0.0
        %602 = vmatprep.subr.mxu0 0.0
        %603 = vmatpush1.msra.mxu0 0.0
        %604 = vmatprep.subr.mxu0 0.0
        %605 = vmatpush1.msra.mxu0 0.0
        %606 = vmatprep.subr.mxu0 0.0
        %607 = vmatpush1.msra.mxu0 0.0
        %608 = vmatprep.subr.mxu0 0.0
        %609 = vmatpush1.msra.mxu0 0.0
        %610 = vmatprep.subr.mxu0 0.0
        %611 = vmatpush1.msra.mxu0 0.0
        %612 = vmatprep.subr.mxu0 0.0
        %613 = vmatpush1.msra.mxu0 0.0
        %614 = vmatprep.subr.mxu0 0.0
        %615 = vmatpush1.msra.mxu0 0.0
        %616 = vmatprep.subr.mxu0 0.0
        %617 = vmatpush1.msra.mxu0 0.0
        %618 = vmatprep.subr.mxu0 0.0
        %619 = vmatpush1.msra.mxu0 0.0
        %620 = vmatprep.subr.mxu0 0.0
        %621 = vmatpush1.msra.mxu0 0.0
        %622 = vmatprep.subr.mxu0 0.0
        %623 = vmatpush1.msra.mxu0 0.0
        %624 = vmatprep.subr.mxu0 0.0
        %625 = vmatpush1.msra.mxu0 0.0
        %626 = vmatprep.subr.mxu0 0.0
        %627 = vmatpush1.msra.mxu0 0.0
        %628 = vmatprep.subr.mxu0 0.0
        %629 = vmatpush1.msra.mxu0 0.0
        %630 = vmatprep.subr.mxu0 0.0
        %631 = vmatpush1.msra.mxu0 0.0
        %632 = vmatprep.subr.mxu0 0.0
        %633 = vmatpush1.msra.mxu0 0.0
        %634 = vmatprep.subr.mxu0 0.0
        %635 = vmatpush1.msra.mxu0 0.0
        %636 = vmatprep.subr.mxu0 0.0
        %637 = vmatpush1.msra.mxu0 0.0
        %638 = vmatprep.subr.mxu0 0.0
        %639 = vmatpush1.msra.mxu0 0.0
        %640 = vmatprep.subr.mxu0 0.0
        %641 = vmatpush1.msra.mxu0 0.0
        %642 = vmatprep.subr.mxu0 0.0
        %643 = vmatpush1.msra.mxu0 0.0
        %644 = vmatprep.subr.mxu0 0.0
        %645 = vmatpush1.msra.mxu0 0.0
        %646 = vmatprep.subr.mxu0 0.0
        %647 = vmatpush1.msra.mxu0 0.0
        %648 = vmatprep.subr.mxu0 0.0
        %649 = vmatpush1.msra.mxu0 0.0
        %650 = vmatprep.mubr.f32.mxu0 0.0
        %v651 = vand.u32 %v559, 4294901760
        %v652 = vsub.f32 %v559, %v651
        %v653 = vand.u32 %v652, 4294901760
        %v654 = vsub.f32 %v652, %v653
        %v655 = vand.u32 %v654, 4294901760
        %656 = vmatmul.mubr.f32.gmra.mrb[0].mxu0 %v655
        %v657 = vpop.f32.mrb[0].mxu0
        %v658 = vadd.f32 0.0, %v657
        %v659 = vpop.f32.mrb[0].mxu0
        %v660 = vadd.f32 0.0, %v659
        %661 = vmatprep.mubr.f32.mxu0 0.0
        %v662 = vand.u32 %v562, 4294901760
        %v663 = vsub.f32 %v562, %v662
        %v664 = vand.u32 %v663, 4294901760
        %v665 = vsub.f32 %v663, %v664
        %v666 = vand.u32 %v665, 4294901760
        %667 = vmatmul.mubr.f32.gmra.mrb[0].mxu0 %v666
        %v668 = vpop.f32.mrb[0].mxu0
        %v669 = vadd.f32 0.0, %v668
        %v670 = vpop.f32.mrb[0].mxu0
        %v671 = vadd.f32 0.0, %v670
        %672 = vmatprep.mubr.f32.mxu0 0.0
        %v673 = vand.u32 %v565, 4294901760
        %v674 = vsub.f32 %v565, %v673
        %v675 = vand.u32 %v674, 4294901760
        %v676 = vsub.f32 %v674, %v675
        %v677 = vand.u32 %v676, 4294901760
        %678 = vmatmul.mubr.f32.gmra.mrb[0].mxu0 %v677
        %v679 = vpop.f32.mrb[0].mxu0
        %v680 = vadd.f32 0.0, %v679
        %v681 = vpop.f32.mrb[0].mxu0
        %v682 = vadd.f32 0.0, %v681
        %683 = vmatprep.mubr.f32.mxu0 0.0
        %v684 = vand.u32 %v568, 4294901760
        %v685 = vsub.f32 %v568, %v684
        %v686 = vand.u32 %v685, 4294901760
        %v687 = vsub.f32 %v685, %v686
        %v688 = vand.u32 %v687, 4294901760
        %689 = vmatmul.mubr.f32.gmra.mrb[0].mxu0 %v688
        %v690 = vpop.f32.mrb[0].mxu0
        %v691 = vadd.f32 0.0, %v690
        %v692 = vpop.f32.mrb[0].mxu0
        %v693 = vadd.f32 0.0, %v692
        %694 = vmatprep.mubr.f32.mxu0 0.0
        %v695 = vand.u32 %v571, 4294901760
        %v696 = vsub.f32 %v571, %v695
        %v697 = vand.u32 %v696, 4294901760
        %v698 = vsub.f32 %v696, %v697
        %v699 = vand.u32 %v698, 4294901760
        %700 = vmatmul.mubr.f32.gmra.mrb[0].mxu0 %v699
        %v701 = vpop.f32.mrb[0].mxu0
        %v702 = vadd.f32 0.0, %v701
        %v703 = vpop.f32.mrb[0].mxu0
        %v704 = vadd.f32 0.0, %v703
        %705 = vmatprep.mubr.f32.mxu0 0.0
        %v706 = vand.u32 %v574, 4294901760
        %v707 = vsub.f32 %v574, %v706
        %v708 = vand.u32 %v707, 4294901760
        %v709 = vsub.f32 %v707, %v708
        %v710 = vand.u32 %v709, 4294901760
        %711 = vmatmul.mubr.f32.gmra.mrb[0].mxu0 %v710
        %v712 = vpop.f32.mrb[0].mxu0
        %v713 = vadd.f32 0.0, %v712
        %v714 = vpop.f32.mrb[0].mxu0
        %v715 = vadd.f32 0.0, %v714
        %716 = vmatprep.mubr.f32.mxu0 0.0
        %v717 = vand.u32 %v577, 4294901760
        %v718 = vsub.f32 %v577, %v717
        %v719 = vand.u32 %v718, 4294901760
        %v720 = vsub.f32 %v718, %v719
        %v721 = vand.u32 %v720, 4294901760
        %722 = vmatmul.mubr.f32.gmra.mrb[0].mxu0 %v721
        %v723 = vpop.f32.mrb[0].mxu0
        %v724 = vadd.f32 0.0, %v723
        %v725 = vpop.f32.mrb[0].mxu0
        %v726 = vadd.f32 0.0, %v725
        %727 = vmatprep.mubr.f32.mxu0 0.0
        %v728 = vand.u32 %v580, 4294901760
        %v729 = vsub.f32 %v580, %v728
        %v730 = vand.u32 %v729, 4294901760
        %v731 = vsub.f32 %v729, %v730
        %v732 = vand.u32 %v731, 4294901760
        %733 = vmatmul.mubr.f32.gmra.mrb[0].mxu0 %v732
        %v734 = vpop.f32.mrb[0].mxu0
        %v735 = vadd.f32 0.0, %v734
        %v736 = vpop.f32.mrb[0].mxu0
        %v737 = vadd.f32 0.0, %v736
        %738 = vdwg.mxu0
        %v739 = vand.u32 %v470, 4294901760
        %v740 = vsub.f32 %v470, %v739
        %v741 = vand.u32 %v740, 4294901760
        %v742 = vsub.f32 %v740, %v741
        %v743 = vand.u32 %v742, 4294901760
        %744 = vmatprep.subr.mxu0 %v743
        %v745 = vand.u32 %v469, 4294901760
        %v746 = vsub.f32 %v469, %v745
        %v747 = vand.u32 %v746, 4294901760
        %v748 = vsub.f32 %v746, %v747
        %v749 = vand.u32 %v748, 4294901760
        %750 = vmatpush1.msra.mxu0 %v749
        %v751 = vand.u32 %v472, 4294901760
        %v752 = vsub.f32 %v472, %v751
        %v753 = vand.u32 %v752, 4294901760
        %v754 = vsub.f32 %v752, %v753
        %v755 = vand.u32 %v754, 4294901760
        %756 = vmatprep.subr.mxu0 %v755
        %v757 = vand.u32 %v471, 4294901760
        %v758 = vsub.f32 %v471, %v757
        %v759 = vand.u32 %v758, 4294901760
        %v760 = vsub.f32 %v758, %v759
        %v761 = vand.u32 %v760, 4294901760
        %762 = vmatpush1.msra.mxu0 %v761
        %763 = vmatprep.subr.mxu0 0.0
        %764 = vmatpush1.msra.mxu0 0.0
        %765 = vmatprep.subr.mxu0 0.0
        %766 = vmatpush1.msra.mxu0 0.0
        %767 = vmatprep.subr.mxu0 0.0
        %768 = vmatpush1.msra.mxu0 0.0
        %769 = vmatprep.subr.mxu0 0.0
        %770 = vmatpush1.msra.mxu0 0.0
        %771 = vmatprep.subr.mxu0 0.0
        %772 = vmatpush1.msra.mxu0 0.0
        %773 = vmatprep.subr.mxu0 0.0
        %774 = vmatpush1.msra.mxu0 0.0
        %775 = vmatprep.subr.mxu0 0.0
        %776 = vmatpush1.msra.mxu0 0.0
        %777 = vmatprep.subr.mxu0 0.0
        %778 = vmatpush1.msra.mxu0 0.0
        %779 = vmatprep.subr.mxu0 0.0
        %780 = vmatpush1.msra.mxu0 0.0
        %781 = vmatprep.subr.mxu0 0.0
        %782 = vmatpush1.msra.mxu0 0.0
        %783 = vmatprep.subr.mxu0 0.0
        %784 = vmatpush1.msra.mxu0 0.0
        %785 = vmatprep.subr.mxu0 0.0
        %786 = vmatpush1.msra.mxu0 0.0
        %787 = vmatprep.subr.mxu0 0.0
        %788 = vmatpush1.msra.mxu0 0.0
        %789 = vmatprep.subr.mxu0 0.0
        %790 = vmatpush1.msra.mxu0 0.0
        %791 = vmatprep.subr.mxu0 0.0
        %792 = vmatpush1.msra.mxu0 0.0
        %793 = vmatprep.subr.mxu0 0.0
        %794 = vmatpush1.msra.mxu0 0.0
        %795 = vmatprep.subr.mxu0 0.0
        %796 = vmatpush1.msra.mxu0 0.0
        %797 = vmatprep.subr.mxu0 0.0
        %798 = vmatpush1.msra.mxu0 0.0
        %799 = vmatprep.subr.mxu0 0.0
        %800 = vmatpush1.msra.mxu0 0.0
        %801 = vmatprep.subr.mxu0 0.0
        %802 = vmatpush1.msra.mxu0 0.0
        %803 = vmatprep.subr.mxu0 0.0
        %804 = vmatpush1.msra.mxu0 0.0
        %805 = vmatprep.subr.mxu0 0.0
        %806 = vmatpush1.msra.mxu0 0.0
        %807 = vmatprep.subr.mxu0 0.0
        %808 = vmatpush1.msra.mxu0 0.0
        %809 = vmatprep.subr.mxu0 0.0
        %810 = vmatpush1.msra.mxu0 0.0
        %811 = vmatprep.subr.mxu0 0.0
        %812 = vmatpush1.msra.mxu0 0.0
        %813 = vmatprep.subr.mxu0 0.0
        %814 = vmatpush1.msra.mxu0 0.0
        %815 = vmatprep.subr.mxu0 0.0
        %816 = vmatpush1.msra.mxu0 0.0
        %817 = vmatprep.subr.mxu0 0.0
        %818 = vmatpush1.msra.mxu0 0.0
        %819 = vmatprep.subr.mxu0 0.0
        %820 = vmatpush1.msra.mxu0 0.0
        %821 = vmatprep.subr.mxu0 0.0
        %822 = vmatpush1.msra.mxu0 0.0
        %823 = vmatprep.mubr.f32.mxu0 0.0
        %v824 = vand.u32 %v559, 4294901760
        %825 = vmatmul.mubr.f32.gmra.mrb[0].mxu0 %v824
        %v826 = vpop.f32.mrb[0].mxu0
        %v827 = vadd.f32 %v658, %v826
        %v828 = vpop.f32.mrb[0].mxu0
        %v829 = vadd.f32 %v660, %v828
        %830 = vmatprep.mubr.f32.mxu0 0.0
        %v831 = vand.u32 %v562, 4294901760
        %832 = vmatmul.mubr.f32.gmra.mrb[0].mxu0 %v831
        %v833 = vpop.f32.mrb[0].mxu0
        %v834 = vadd.f32 %v669, %v833
        %v835 = vpop.f32.mrb[0].mxu0
        %v836 = vadd.f32 %v671, %v835
        %837 = vmatprep.mubr.f32.mxu0 0.0
        %v838 = vand.u32 %v565, 4294901760
        %839 = vmatmul.mubr.f32.gmra.mrb[0].mxu0 %v838
        %v840 = vpop.f32.mrb[0].mxu0
        %v841 = vadd.f32 %v680, %v840
        %v842 = vpop.f32.mrb[0].mxu0
        %v843 = vadd.f32 %v682, %v842
        %844 = vmatprep.mubr.f32.mxu0 0.0
        %v845 = vand.u32 %v568, 4294901760
        %846 = vmatmul.mubr.f32.gmra.mrb[0].mxu0 %v845
        %v847 = vpop.f32.mrb[0].mxu0
        %v848 = vadd.f32 %v691, %v847
        %v849 = vpop.f32.mrb[0].mxu0
        %v850 = vadd.f32 %v693, %v849
        %851 = vmatprep.mubr.f32.mxu0 0.0
        %v852 = vand.u32 %v571, 4294901760
        %853 = vmatmul.mubr.f32.gmra.mrb[0].mxu0 %v852
        %v854 = vpop.f32.mrb[0].mxu0
        %v855 = vadd.f32 %v702, %v854
        %v856 = vpop.f32.mrb[0].mxu0
        %v857 = vadd.f32 %v704, %v856
        %858 = vmatprep.mubr.f32.mxu0 0.0
        %v859 = vand.u32 %v574, 4294901760
        %860 = vmatmul.mubr.f32.gmra.mrb[0].mxu0 %v859
        %v861 = vpop.f32.mrb[0].mxu0
        %v862 = vadd.f32 %v713, %v861
        %v863 = vpop.f32.mrb[0].mxu0
        %v864 = vadd.f32 %v715, %v863
        %865 = vmatprep.mubr.f32.mxu0 0.0
        %v866 = vand.u32 %v577, 4294901760
        %867 = vmatmul.mubr.f32.gmra.mrb[0].mxu0 %v866
        %v868 = vpop.f32.mrb[0].mxu0
        %v869 = vadd.f32 %v724, %v868
        %v870 = vpop.f32.mrb[0].mxu0
        %v871 = vadd.f32 %v726, %v870
        %872 = vmatprep.mubr.f32.mxu0 0.0
        %v873 = vand.u32 %v580, 4294901760
        %874 = vmatmul.mubr.f32.gmra.mrb[0].mxu0 %v873
        %v875 = vpop.f32.mrb[0].mxu0
        %v876 = vadd.f32 %v735, %v875
        %v877 = vpop.f32.mrb[0].mxu0
        %v878 = vadd.f32 %v737, %v877
        %879 = vdwg.mxu0
        %v880 = vand.u32 %v470, 4294901760
        %v881 = vsub.f32 %v470, %v880
        %882 = vmatprep.subr.mxu0 %v881
        %v883 = vand.u32 %v469, 4294901760
        %v884 = vsub.f32 %v469, %v883
        %885 = vmatpush1.msra.mxu0 %v884
        %v886 = vand.u32 %v472, 4294901760
        %v887 = vsub.f32 %v472, %v886
        %888 = vmatprep.subr.mxu0 %v887
        %v889 = vand.u32 %v471, 4294901760
        %v890 = vsub.f32 %v471, %v889
        %891 = vmatpush1.msra.mxu0 %v890
        %892 = vmatprep.subr.mxu0 0.0
        %893 = vmatpush1.msra.mxu0 0.0
        %894 = vmatprep.subr.mxu0 0.0
        %895 = vmatpush1.msra.mxu0 0.0
        %896 = vmatprep.subr.mxu0 0.0
        %897 = vmatpush1.msra.mxu0 0.0
        %898 = vmatprep.subr.mxu0 0.0
        %899 = vmatpush1.msra.mxu0 0.0
        %900 = vmatprep.subr.mxu0 0.0
        %901 = vmatpush1.msra.mxu0 0.0
        %902 = vmatprep.subr.mxu0 0.0
        %903 = vmatpush1.msra.mxu0 0.0
        %904 = vmatprep.subr.mxu0 0.0
        %905 = vmatpush1.msra.mxu0 0.0
        %906 = vmatprep.subr.mxu0 0.0
        %907 = vmatpush1.msra.mxu0 0.0
        %908 = vmatprep.subr.mxu0 0.0
        %909 = vmatpush1.msra.mxu0 0.0
        %910 = vmatprep.subr.mxu0 0.0
        %911 = vmatpush1.msra.mxu0 0.0
        %912 = vmatprep.subr.mxu0 0.0
        %913 = vmatpush1.msra.mxu0 0.0
        %914 = vmatprep.subr.mxu0 0.0
        %915 = vmatpush1.msra.mxu0 0.0
        %916 = vmatprep.subr.mxu0 0.0
        %917 = vmatpush1.msra.mxu0 0.0
        %918 = vmatprep.subr.mxu0 0.0
        %919 = vmatpush1.msra.mxu0 0.0
        %920 = vmatprep.subr.mxu0 0.0
        %921 = vmatpush1.msra.mxu0 0.0
        %922 = vmatprep.subr.mxu0 0.0
        %923 = vmatpush1.msra.mxu0 0.0
        %924 = vmatprep.subr.mxu0 0.0
        %925 = vmatpush1.msra.mxu0 0.0
        %926 = vmatprep.subr.mxu0 0.0
        %927 = vmatpush1.msra.mxu0 0.0
        %928 = vmatprep.subr.mxu0 0.0
        %929 = vmatpush1.msra.mxu0 0.0
        %930 = vmatprep.subr.mxu0 0.0
        %931 = vmatpush1.msra.mxu0 0.0
        %932 = vmatprep.subr.mxu0 0.0
        %933 = vmatpush1.msra.mxu0 0.0
        %934 = vmatprep.subr.mxu0 0.0
        %935 = vmatpush1.msra.mxu0 0.0
        %936 = vmatprep.subr.mxu0 0.0
        %937 = vmatpush1.msra.mxu0 0.0
        %938 = vmatprep.subr.mxu0 0.0
        %939 = vmatpush1.msra.mxu0 0.0
        %940 = vmatprep.subr.mxu0 0.0
        %941 = vmatpush1.msra.mxu0 0.0
        %942 = vmatprep.subr.mxu0 0.0
        %943 = vmatpush1.msra.mxu0 0.0
        %944 = vmatprep.subr.mxu0 0.0
        %945 = vmatpush1.msra.mxu0 0.0
        %946 = vmatprep.subr.mxu0 0.0
        %947 = vmatpush1.msra.mxu0 0.0
        %948 = vmatprep.subr.mxu0 0.0
        %949 = vmatpush1.msra.mxu0 0.0
        %950 = vmatprep.subr.mxu0 0.0
        %951 = vmatpush1.msra.mxu0 0.0
        %952 = vmatprep.mubr.f32.mxu0 0.0
        %v953 = vand.u32 %v559, 4294901760
        %v954 = vsub.f32 %v559, %v953
        %955 = vmatmul.mubr.f32.gmra.mrb[0].mxu0 %v954
        %v956 = vpop.f32.mrb[0].mxu0
        %v957 = vadd.f32 %v827, %v956
        %v958 = vpop.f32.mrb[0].mxu0
        %v959 = vadd.f32 %v829, %v958
        %960 = vmatprep.mubr.f32.mxu0 0.0
        %v961 = vand.u32 %v562, 4294901760
        %v962 = vsub.f32 %v562, %v961
        %963 = vmatmul.mubr.f32.gmra.mrb[0].mxu0 %v962
        %v964 = vpop.f32.mrb[0].mxu0
        %v965 = vadd.f32 %v834, %v964
        %v966 = vpop.f32.mrb[0].mxu0
        %v967 = vadd.f32 %v836, %v966
        %968 = vmatprep.mubr.f32.mxu0 0.0
        %v969 = vand.u32 %v565, 4294901760
        %v970 = vsub.f32 %v565, %v969
        %971 = vmatmul.mubr.f32.gmra.mrb[0].mxu0 %v970
        %v972 = vpop.f32.mrb[0].mxu0
        %v973 = vadd.f32 %v841, %v972
        %v974 = vpop.f32.mrb[0].mxu0
        %v975 = vadd.f32 %v843, %v974
        %976 = vmatprep.mubr.f32.mxu0 0.0
        %v977 = vand.u32 %v568, 4294901760
        %v978 = vsub.f32 %v568, %v977
        %979 = vmatmul.mubr.f32.gmra.mrb[0].mxu0 %v978
        %v980 = vpop.f32.mrb[0].mxu0
        %v981 = vadd.f32 %v848, %v980
        %v982 = vpop.f32.mrb[0].mxu0
        %v983 = vadd.f32 %v850, %v982
        %984 = vmatprep.mubr.f32.mxu0 0.0
        %v985 = vand.u32 %v571, 4294901760
        %v986 = vsub.f32 %v571, %v985
        %987 = vmatmul.mubr.f32.gmra.mrb[0].mxu0 %v986
        %v988 = vpop.f32.mrb[0].mxu0
        %v989 = vadd.f32 %v855, %v988
        %v990 = vpop.f32.mrb[0].mxu0
        %v991 = vadd.f32 %v857, %v990
        %992 = vmatprep.mubr.f32.mxu0 0.0
        %v993 = vand.u32 %v574, 4294901760
        %v994 = vsub.f32 %v574, %v993
        %995 = vmatmul.mubr.f32.gmra.mrb[0].mxu0 %v994
        %v996 = vpop.f32.mrb[0].mxu0
        %v997 = vadd.f32 %v862, %v996
        %v998 = vpop.f32.mrb[0].mxu0
        %v999 = vadd.f32 %v864, %v998
        %1000 = vmatprep.mubr.f32.mxu0 0.0
        %v1001 = vand.u32 %v577, 4294901760
        %v1002 = vsub.f32 %v577, %v1001
        %1003 = vmatmul.mubr.f32.gmra.mrb[0].mxu0 %v1002
        %v1004 = vpop.f32.mrb[0].mxu0
        %v1005 = vadd.f32 %v869, %v1004
        %v1006 = vpop.f32.mrb[0].mxu0
        %v1007 = vadd.f32 %v871, %v1006
        %1008 = vmatprep.mubr.f32.mxu0 0.0
        %v1009 = vand.u32 %v580, 4294901760
        %v1010 = vsub.f32 %v580, %v1009
        %1011 = vmatmul.mubr.f32.gmra.mrb[0].mxu0 %v1010
        %v1012 = vpop.f32.mrb[0].mxu0
        %v1013 = vadd.f32 %v876, %v1012
        %v1014 = vpop.f32.mrb[0].mxu0
        %v1015 = vadd.f32 %v878, %v1014
        %1016 = vdwg.mxu0
        %v1017 = vand.u32 %v470, 4294901760
        %1018 = vmatprep.subr.mxu0 %v1017
        %v1019 = vand.u32 %v469, 4294901760
        %1020 = vmatpush1.msra.mxu0 %v1019
        %v1021 = vand.u32 %v472, 4294901760
        %1022 = vmatprep.subr.mxu0 %v1021
        %v1023 = vand.u32 %v471, 4294901760
        %1024 = vmatpush1.msra.mxu0 %v1023
        %1025 = vmatprep.subr.mxu0 0.0
        %1026 = vmatpush1.msra.mxu0 0.0
        %1027 = vmatprep.subr.mxu0 0.0
        %1028 = vmatpush1.msra.mxu0 0.0
        %1029 = vmatprep.subr.mxu0 0.0
        %1030 = vmatpush1.msra.mxu0 0.0
        %1031 = vmatprep.subr.mxu0 0.0
        %1032 = vmatpush1.msra.mxu0 0.0
        %1033 = vmatprep.subr.mxu0 0.0
        %1034 = vmatpush1.msra.mxu0 0.0
        %1035 = vmatprep.subr.mxu0 0.0
        %1036 = vmatpush1.msra.mxu0 0.0
        %1037 = vmatprep.subr.mxu0 0.0
        %1038 = vmatpush1.msra.mxu0 0.0
        %1039 = vmatprep.subr.mxu0 0.0
        %1040 = vmatpush1.msra.mxu0 0.0
        %1041 = vmatprep.subr.mxu0 0.0
        %1042 = vmatpush1.msra.mxu0 0.0
        %1043 = vmatprep.subr.mxu0 0.0
        %1044 = vmatpush1.msra.mxu0 0.0
        %1045 = vmatprep.subr.mxu0 0.0
        %1046 = vmatpush1.msra.mxu0 0.0
        %1047 = vmatprep.subr.mxu0 0.0
        %1048 = vmatpush1.msra.mxu0 0.0
        %1049 = vmatprep.subr.mxu0 0.0
        %1050 = vmatpush1.msra.mxu0 0.0
        %1051 = vmatprep.subr.mxu0 0.0
        %1052 = vmatpush1.msra.mxu0 0.0
        %1053 = vmatprep.subr.mxu0 0.0
        %1054 = vmatpush1.msra.mxu0 0.0
        %1055 = vmatprep.subr.mxu0 0.0
        %1056 = vmatpush1.msra.mxu0 0.0
        %1057 = vmatprep.subr.mxu0 0.0
        %1058 = vmatpush1.msra.mxu0 0.0
        %1059 = vmatprep.subr.mxu0 0.0
        %1060 = vmatpush1.msra.mxu0 0.0
        %1061 = vmatprep.subr.mxu0 0.0
        %1062 = vmatpush1.msra.mxu0 0.0
        %1063 = vmatprep.subr.mxu0 0.0
        %1064 = vmatpush1.msra.mxu0 0.0
        %1065 = vmatprep.subr.mxu0 0.0
        %1066 = vmatpush1.msra.mxu0 0.0
        %1067 = vmatprep.subr.mxu0 0.0
        %1068 = vmatpush1.msra.mxu0 0.0
        %1069 = vmatprep.subr.mxu0 0.0
        %1070 = vmatpush1.msra.mxu0 0.0
        %1071 = vmatprep.subr.mxu0 0.0
        %1072 = vmatpush1.msra.mxu0 0.0
        %1073 = vmatprep.subr.mxu0 0.0
        %1074 = vmatpush1.msra.mxu0 0.0
        %1075 = vmatprep.subr.mxu0 0.0
        %1076 = vmatpush1.msra.mxu0 0.0
        %1077 = vmatprep.subr.mxu0 0.0
        %1078 = vmatpush1.msra.mxu0 0.0
        %1079 = vmatprep.subr.mxu0 0.0
        %1080 = vmatpush1.msra.mxu0 0.0
        %1081 = vmatprep.subr.mxu0 0.0
        %1082 = vmatpush1.msra.mxu0 0.0
        %1083 = vmatprep.subr.mxu0 0.0
        %1084 = vmatpush1.msra.mxu0 0.0
        %1085 = vmatprep.mubr.f32.mxu0 0.0
        %v1086 = vand.u32 %v559, 4294901760
        %v1087 = vsub.f32 %v559, %v1086
        %v1088 = vand.u32 %v1087, 4294901760
        %1089 = vmatmul.mubr.f32.gmra.mrb[0].mxu0 %v1088
        %v1090 = vpop.f32.mrb[0].mxu0
        %v1091 = vadd.f32 %v957, %v1090
        %v1092 = vpop.f32.mrb[0].mxu0
        %v1093 = vadd.f32 %v959, %v1092
        %1094 = vmatprep.mubr.f32.mxu0 0.0
        %v1095 = vand.u32 %v562, 4294901760
        %v1096 = vsub.f32 %v562, %v1095
        %v1097 = vand.u32 %v1096, 4294901760
        %1098 = vmatmul.mubr.f32.gmra.mrb[0].mxu0 %v1097
        %v1099 = vpop.f32.mrb[0].mxu0
        %v1100 = vadd.f32 %v965, %v1099
        %v1101 = vpop.f32.mrb[0].mxu0
        %v1102 = vadd.f32 %v967, %v1101
        %1103 = vmatprep.mubr.f32.mxu0 0.0
        %v1104 = vand.u32 %v565, 4294901760
        %v1105 = vsub.f32 %v565, %v1104
        %v1106 = vand.u32 %v1105, 4294901760
        %1107 = vmatmul.mubr.f32.gmra.mrb[0].mxu0 %v1106
        %v1108 = vpop.f32.mrb[0].mxu0
        %v1109 = vadd.f32 %v973, %v1108
        %v1110 = vpop.f32.mrb[0].mxu0
        %v1111 = vadd.f32 %v975, %v1110
        %1112 = vmatprep.mubr.f32.mxu0 0.0
        %v1113 = vand.u32 %v568, 4294901760
        %v1114 = vsub.f32 %v568, %v1113
        %v1115 = vand.u32 %v1114, 4294901760
        %1116 = vmatmul.mubr.f32.gmra.mrb[0].mxu0 %v1115
        %v1117 = vpop.f32.mrb[0].mxu0
        %v1118 = vadd.f32 %v981, %v1117
        %v1119 = vpop.f32.mrb[0].mxu0
        %v1120 = vadd.f32 %v983, %v1119
        %1121 = vmatprep.mubr.f32.mxu0 0.0
        %v1122 = vand.u32 %v571, 4294901760
        %v1123 = vsub.f32 %v571, %v1122
        %v1124 = vand.u32 %v1123, 4294901760
        %1125 = vmatmul.mubr.f32.gmra.mrb[0].mxu0 %v1124
        %v1126 = vpop.f32.mrb[0].mxu0
        %v1127 = vadd.f32 %v989, %v1126
        %v1128 = vpop.f32.mrb[0].mxu0
        %v1129 = vadd.f32 %v991, %v1128
        %1130 = vmatprep.mubr.f32.mxu0 0.0
        %v1131 = vand.u32 %v574, 4294901760
        %v1132 = vsub.f32 %v574, %v1131
        %v1133 = vand.u32 %v1132, 4294901760
        %1134 = vmatmul.mubr.f32.gmra.mrb[0].mxu0 %v1133
        %v1135 = vpop.f32.mrb[0].mxu0
        %v1136 = vadd.f32 %v997, %v1135
        %v1137 = vpop.f32.mrb[0].mxu0
        %v1138 = vadd.f32 %v999, %v1137
        %1139 = vmatprep.mubr.f32.mxu0 0.0
        %v1140 = vand.u32 %v577, 4294901760
        %v1141 = vsub.f32 %v577, %v1140
        %v1142 = vand.u32 %v1141, 4294901760
        %1143 = vmatmul.mubr.f32.gmra.mrb[0].mxu0 %v1142
        %v1144 = vpop.f32.mrb[0].mxu0
        %v1145 = vadd.f32 %v1005, %v1144
        %v1146 = vpop.f32.mrb[0].mxu0
        %v1147 = vadd.f32 %v1007, %v1146
        %1148 = vmatprep.mubr.f32.mxu0 0.0
        %v1149 = vand.u32 %v580, 4294901760
        %v1150 = vsub.f32 %v580, %v1149
        %v1151 = vand.u32 %v1150, 4294901760
        %1152 = vmatmul.mubr.f32.gmra.mrb[0].mxu0 %v1151
        %v1153 = vpop.f32.mrb[0].mxu0
        %v1154 = vadd.f32 %v1013, %v1153
        %v1155 = vpop.f32.mrb[0].mxu0
        %v1156 = vadd.f32 %v1015, %v1155
        %1157 = vdwg.mxu0
        %v1158 = vand.u32 %v470, 4294901760
        %v1159 = vsub.f32 %v470, %v1158
        %v1160 = vand.u32 %v1159, 4294901760
        %1161 = vmatprep.subr.mxu0 %v1160
        %v1162 = vand.u32 %v469, 4294901760
        %v1163 = vsub.f32 %v469, %v1162
        %v1164 = vand.u32 %v1163, 4294901760
        %1165 = vmatpush1.msra.mxu0 %v1164
        %v1166 = vand.u32 %v472, 4294901760
        %v1167 = vsub.f32 %v472, %v1166
        %v1168 = vand.u32 %v1167, 4294901760
        %1169 = vmatprep.subr.mxu0 %v1168
        %v1170 = vand.u32 %v471, 4294901760
        %v1171 = vsub.f32 %v471, %v1170
        %v1172 = vand.u32 %v1171, 4294901760
        %1173 = vmatpush1.msra.mxu0 %v1172
        %1174 = vmatprep.subr.mxu0 0.0
        %1175 = vmatpush1.msra.mxu0 0.0
        %1176 = vmatprep.subr.mxu0 0.0
        %1177 = vmatpush1.msra.mxu0 0.0
        %1178 = vmatprep.subr.mxu0 0.0
        %1179 = vmatpush1.msra.mxu0 0.0
        %1180 = vmatprep.subr.mxu0 0.0
        %1181 = vmatpush1.msra.mxu0 0.0
        %1182 = vmatprep.subr.mxu0 0.0
        %1183 = vmatpush1.msra.mxu0 0.0
        %1184 = vmatprep.subr.mxu0 0.0
        %1185 = vmatpush1.msra.mxu0 0.0
        %1186 = vmatprep.subr.mxu0 0.0
        %1187 = vmatpush1.msra.mxu0 0.0
        %1188 = vmatprep.subr.mxu0 0.0
        %1189 = vmatpush1.msra.mxu0 0.0
        %1190 = vmatprep.subr.mxu0 0.0
        %1191 = vmatpush1.msra.mxu0 0.0
        %1192 = vmatprep.subr.mxu0 0.0
        %1193 = vmatpush1.msra.mxu0 0.0
        %1194 = vmatprep.subr.mxu0 0.0
        %1195 = vmatpush1.msra.mxu0 0.0
        %1196 = vmatprep.subr.mxu0 0.0
        %1197 = vmatpush1.msra.mxu0 0.0
        %1198 = vmatprep.subr.mxu0 0.0
        %1199 = vmatpush1.msra.mxu0 0.0
        %1200 = vmatprep.subr.mxu0 0.0
        %1201 = vmatpush1.msra.mxu0 0.0
        %1202 = vmatprep.subr.mxu0 0.0
        %1203 = vmatpush1.msra.mxu0 0.0
        %1204 = vmatprep.subr.mxu0 0.0
        %1205 = vmatpush1.msra.mxu0 0.0
        %1206 = vmatprep.subr.mxu0 0.0
        %1207 = vmatpush1.msra.mxu0 0.0
        %1208 = vmatprep.subr.mxu0 0.0
        %1209 = vmatpush1.msra.mxu0 0.0
        %1210 = vmatprep.subr.mxu0 0.0
        %1211 = vmatpush1.msra.mxu0 0.0
        %1212 = vmatprep.subr.mxu0 0.0
        %1213 = vmatpush1.msra.mxu0 0.0
        %1214 = vmatprep.subr.mxu0 0.0
        %1215 = vmatpush1.msra.mxu0 0.0
        %1216 = vmatprep.subr.mxu0 0.0
        %1217 = vmatpush1.msra.mxu0 0.0
        %1218 = vmatprep.subr.mxu0 0.0
        %1219 = vmatpush1.msra.mxu0 0.0
        %1220 = vmatprep.subr.mxu0 0.0
        %1221 = vmatpush1.msra.mxu0 0.0
        %1222 = vmatprep.subr.mxu0 0.0
        %1223 = vmatpush1.msra.mxu0 0.0
        %1224 = vmatprep.subr.mxu0 0.0
        %1225 = vmatpush1.msra.mxu0 0.0
        %1226 = vmatprep.subr.mxu0 0.0
        %1227 = vmatpush1.msra.mxu0 0.0
        %1228 = vmatprep.subr.mxu0 0.0
        %1229 = vmatpush1.msra.mxu0 0.0
        %1230 = vmatprep.subr.mxu0 0.0
        %1231 = vmatpush1.msra.mxu0 0.0
        %1232 = vmatprep.subr.mxu0 0.0
        %1233 = vmatpush1.msra.mxu0 0.0
        %1234 = vmatprep.mubr.f32.mxu0 0.0
        %v1235 = vand.u32 %v559, 4294901760
        %1236 = vmatmul.mubr.f32.gmra.mrb[0].mxu0 %v1235
        %v1237 = vpop.f32.mrb[0].mxu0
        %v1238 = vadd.f32 %v1091, %v1237
        %v1239 = vpop.f32.mrb[0].mxu0
        %v1240 = vadd.f32 %v1093, %v1239
        %1241 = vmatprep.mubr.f32.mxu0 0.0
        %v1242 = vand.u32 %v562, 4294901760
        %1243 = vmatmul.mubr.f32.gmra.mrb[0].mxu0 %v1242
        %v1244 = vpop.f32.mrb[0].mxu0
        %v1245 = vadd.f32 %v1100, %v1244
        %v1246 = vpop.f32.mrb[0].mxu0
        %v1247 = vadd.f32 %v1102, %v1246
        %1248 = vmatprep.mubr.f32.mxu0 0.0
        %v1249 = vand.u32 %v565, 4294901760
        %1250 = vmatmul.mubr.f32.gmra.mrb[0].mxu0 %v1249
        %v1251 = vpop.f32.mrb[0].mxu0
        %v1252 = vadd.f32 %v1109, %v1251
        %v1253 = vpop.f32.mrb[0].mxu0
        %v1254 = vadd.f32 %v1111, %v1253
        %1255 = vmatprep.mubr.f32.mxu0 0.0
        %v1256 = vand.u32 %v568, 4294901760
        %1257 = vmatmul.mubr.f32.gmra.mrb[0].mxu0 %v1256
        %v1258 = vpop.f32.mrb[0].mxu0
        %v1259 = vadd.f32 %v1118, %v1258
        %v1260 = vpop.f32.mrb[0].mxu0
        %v1261 = vadd.f32 %v1120, %v1260
        %1262 = vmatprep.mubr.f32.mxu0 0.0
        %v1263 = vand.u32 %v571, 4294901760
        %1264 = vmatmul.mubr.f32.gmra.mrb[0].mxu0 %v1263
        %v1265 = vpop.f32.mrb[0].mxu0
        %v1266 = vadd.f32 %v1127, %v1265
        %v1267 = vpop.f32.mrb[0].mxu0
        %v1268 = vadd.f32 %v1129, %v1267
        %1269 = vmatprep.mubr.f32.mxu0 0.0
        %v1270 = vand.u32 %v574, 4294901760
        %1271 = vmatmul.mubr.f32.gmra.mrb[0].mxu0 %v1270
        %v1272 = vpop.f32.mrb[0].mxu0
        %v1273 = vadd.f32 %v1136, %v1272
        %v1274 = vpop.f32.mrb[0].mxu0
        %v1275 = vadd.f32 %v1138, %v1274
        %1276 = vmatprep.mubr.f32.mxu0 0.0
        %v1277 = vand.u32 %v577, 4294901760
        %1278 = vmatmul.mubr.f32.gmra.mrb[0].mxu0 %v1277
        %v1279 = vpop.f32.mrb[0].mxu0
        %v1280 = vadd.f32 %v1145, %v1279
        %v1281 = vpop.f32.mrb[0].mxu0
        %v1282 = vadd.f32 %v1147, %v1281
        %1283 = vmatprep.mubr.f32.mxu0 0.0
        %v1284 = vand.u32 %v580, 4294901760
        %1285 = vmatmul.mubr.f32.gmra.mrb[0].mxu0 %v1284
        %v1286 = vpop.f32.mrb[0].mxu0
        %v1287 = vadd.f32 %v1154, %v1286
        %v1288 = vpop.f32.mrb[0].mxu0
        %v1289 = vadd.f32 %v1156, %v1288
        %1290 = vdwg.mxu0
        %v1291 = vand.u32 %v470, 4294901760
        %1292 = vmatprep.subr.mxu0 %v1291
        %v1293 = vand.u32 %v469, 4294901760
        %1294 = vmatpush1.msra.mxu0 %v1293
        %v1295 = vand.u32 %v472, 4294901760
        %1296 = vmatprep.subr.mxu0 %v1295
        %v1297 = vand.u32 %v471, 4294901760
        %1298 = vmatpush1.msra.mxu0 %v1297
        %1299 = vmatprep.subr.mxu0 0.0
        %1300 = vmatpush1.msra.mxu0 0.0
        %1301 = vmatprep.subr.mxu0 0.0
        %1302 = vmatpush1.msra.mxu0 0.0
        %1303 = vmatprep.subr.mxu0 0.0
        %1304 = vmatpush1.msra.mxu0 0.0
        %1305 = vmatprep.subr.mxu0 0.0
        %1306 = vmatpush1.msra.mxu0 0.0
        %1307 = vmatprep.subr.mxu0 0.0
        %1308 = vmatpush1.msra.mxu0 0.0
        %1309 = vmatprep.subr.mxu0 0.0
        %1310 = vmatpush1.msra.mxu0 0.0
        %1311 = vmatprep.subr.mxu0 0.0
        %1312 = vmatpush1.msra.mxu0 0.0
        %1313 = vmatprep.subr.mxu0 0.0
        %1314 = vmatpush1.msra.mxu0 0.0
        %1315 = vmatprep.subr.mxu0 0.0
        %1316 = vmatpush1.msra.mxu0 0.0
        %1317 = vmatprep.subr.mxu0 0.0
        %1318 = vmatpush1.msra.mxu0 0.0
        %1319 = vmatprep.subr.mxu0 0.0
        %1320 = vmatpush1.msra.mxu0 0.0
        %1321 = vmatprep.subr.mxu0 0.0
        %1322 = vmatpush1.msra.mxu0 0.0
        %1323 = vmatprep.subr.mxu0 0.0
        %1324 = vmatpush1.msra.mxu0 0.0
        %1325 = vmatprep.subr.mxu0 0.0
        %1326 = vmatpush1.msra.mxu0 0.0
        %1327 = vmatprep.subr.mxu0 0.0
        %1328 = vmatpush1.msra.mxu0 0.0
        %1329 = vmatprep.subr.mxu0 0.0
        %1330 = vmatpush1.msra.mxu0 0.0
        %1331 = vmatprep.subr.mxu0 0.0
        %1332 = vmatpush1.msra.mxu0 0.0
        %1333 = vmatprep.subr.mxu0 0.0
        %1334 = vmatpush1.msra.mxu0 0.0
        %1335 = vmatprep.subr.mxu0 0.0
        %1336 = vmatpush1.msra.mxu0 0.0
        %1337 = vmatprep.subr.mxu0 0.0
        %1338 = vmatpush1.msra.mxu0 0.0
        %1339 = vmatprep.subr.mxu0 0.0
        %1340 = vmatpush1.msra.mxu0 0.0
        %1341 = vmatprep.subr.mxu0 0.0
        %1342 = vmatpush1.msra.mxu0 0.0
        %1343 = vmatprep.subr.mxu0 0.0
        %1344 = vmatpush1.msra.mxu0 0.0
        %1345 = vmatprep.subr.mxu0 0.0
        %1346 = vmatpush1.msra.mxu0 0.0
        %1347 = vmatprep.subr.mxu0 0.0
        %1348 = vmatpush1.msra.mxu0 0.0
        %1349 = vmatprep.subr.mxu0 0.0
        %1350 = vmatpush1.msra.mxu0 0.0
        %1351 = vmatprep.subr.mxu0 0.0
        %1352 = vmatpush1.msra.mxu0 0.0
        %1353 = vmatprep.subr.mxu0 0.0
        %1354 = vmatpush1.msra.mxu0 0.0
        %1355 = vmatprep.subr.mxu0 0.0
        %1356 = vmatpush1.msra.mxu0 0.0
        %1357 = vmatprep.subr.mxu0 0.0
        %1358 = vmatpush1.msra.mxu0 0.0
        %1359 = vmatprep.mubr.f32.mxu0 0.0
        %v1360 = vand.u32 %v559, 4294901760
        %1361 = vmatmul.mubr.f32.gmra.mrb[0].mxu0 %v1360
        %v1362 = vpop.f32.mrb[0].mxu0
        %v1363 = vadd.f32 %v1238, %v1362
        %v1364 = vpop.f32.mrb[0].mxu0
        %v1365 = vadd.f32 %v1240, %v1364
        %1366 = vmatprep.mubr.f32.mxu0 0.0
        %v1367 = vand.u32 %v562, 4294901760
        %1368 = vmatmul.mubr.f32.gmra.mrb[0].mxu0 %v1367
        %v1369 = vpop.f32.mrb[0].mxu0
        %v1370 = vadd.f32 %v1245, %v1369
        %v1371 = vpop.f32.mrb[0].mxu0
        %v1372 = vadd.f32 %v1247, %v1371
        %1373 = vmatprep.mubr.f32.mxu0 0.0
        %v1374 = vand.u32 %v565, 4294901760
        %1375 = vmatmul.mubr.f32.gmra.mrb[0].mxu0 %v1374
        %v1376 = vpop.f32.mrb[0].mxu0
        %v1377 = vadd.f32 %v1252, %v1376
        %v1378 = vpop.f32.mrb[0].mxu0
        %v1379 = vadd.f32 %v1254, %v1378
        %1380 = vmatprep.mubr.f32.mxu0 0.0
        %v1381 = vand.u32 %v568, 4294901760
        %1382 = vmatmul.mubr.f32.gmra.mrb[0].mxu0 %v1381
        %v1383 = vpop.f32.mrb[0].mxu0
        %v1384 = vadd.f32 %v1259, %v1383
        %v1385 = vpop.f32.mrb[0].mxu0
        %v1386 = vadd.f32 %v1261, %v1385
        %1387 = vmatprep.mubr.f32.mxu0 0.0
        %v1388 = vand.u32 %v571, 4294901760
        %1389 = vmatmul.mubr.f32.gmra.mrb[0].mxu0 %v1388
        %v1390 = vpop.f32.mrb[0].mxu0
        %v1391 = vadd.f32 %v1266, %v1390
        %v1392 = vpop.f32.mrb[0].mxu0
        %v1393 = vadd.f32 %v1268, %v1392
        %1394 = vmatprep.mubr.f32.mxu0 0.0
        %v1395 = vand.u32 %v574, 4294901760
        %1396 = vmatmul.mubr.f32.gmra.mrb[0].mxu0 %v1395
        %v1397 = vpop.f32.mrb[0].mxu0
        %v1398 = vadd.f32 %v1273, %v1397
        %v1399 = vpop.f32.mrb[0].mxu0
        %v1400 = vadd.f32 %v1275, %v1399
        %1401 = vmatprep.mubr.f32.mxu0 0.0
        %v1402 = vand.u32 %v577, 4294901760
        %1403 = vmatmul.mubr.f32.gmra.mrb[0].mxu0 %v1402
        %v1404 = vpop.f32.mrb[0].mxu0
        %v1405 = vadd.f32 %v1280, %v1404
        %v1406 = vpop.f32.mrb[0].mxu0
        %v1407 = vadd.f32 %v1282, %v1406
        %1408 = vmatprep.mubr.f32.mxu0 0.0
        %v1409 = vand.u32 %v580, 4294901760
        %1410 = vmatmul.mubr.f32.gmra.mrb[0].mxu0 %v1409
        %v1411 = vpop.f32.mrb[0].mxu0
        %v1412 = vadd.f32 %v1287, %v1411
        %v1413 = vpop.f32.mrb[0].mxu0
        %v1414 = vadd.f32 %v1289, %v1413
        %1415 = vdwg.mxu0
        %v1416 = vmul.f32 %v1363, %v545
        %v1417 = vmul.f32 %v1365, %v546
        %v1418 = vmul.f32 %v1370, %v547
        %v1419 = vmul.f32 %v1372, %v548
        %v1420 = vadd.f32 %v1416, %v1418
        %v1421 = vrot.slane %v1420, 4
        %v1422 = vadd.f32 %v1420, %v1421
        %v1423 = vrot.slane %v1422, 2
        %v1424 = vadd.f32 %v1422, %v1423
        %v1425 = vrot.slane %v1424, 1
        %v1426 = vadd.f32 %v1424, %v1425
        %v1427 = vadd.f32 %v1417, %v1419
        %v1428 = vrot.slane %v1427, 4
        %v1429 = vadd.f32 %v1427, %v1428
        %v1430 = vrot.slane %v1429, 2
        %v1431 = vadd.f32 %v1429, %v1430
        %v1432 = vrot.slane %v1431, 1
        %v1433 = vadd.f32 %v1431, %v1432
        %v1434 = vmul.f32 %v1377, %v545
        %v1435 = vmul.f32 %v1379, %v546
        %v1436 = vmul.f32 %v1384, %v547
        %v1437 = vmul.f32 %v1386, %v548
        %v1438 = vadd.f32 %v1434, %v1436
        %v1439 = vrot.slane %v1438, 4
        %v1440 = vadd.f32 %v1438, %v1439
        %v1441 = vrot.slane %v1440, 2
        %v1442 = vadd.f32 %v1440, %v1441
        %v1443 = vrot.slane %v1442, 1
        %v1444 = vadd.f32 %v1442, %v1443
        %v1445 = vadd.f32 %v1435, %v1437
        %v1446 = vrot.slane %v1445, 4
        %v1447 = vadd.f32 %v1445, %v1446
        %v1448 = vrot.slane %v1447, 2
        %v1449 = vadd.f32 %v1447, %v1448
        %v1450 = vrot.slane %v1449, 1
        %v1451 = vadd.f32 %v1449, %v1450
        %v1452 = vmul.f32 %v1391, %v545
        %v1453 = vmul.f32 %v1393, %v546
        %v1454 = vmul.f32 %v1398, %v547
        %v1455 = vmul.f32 %v1400, %v548
        %v1456 = vadd.f32 %v1452, %v1454
        %v1457 = vrot.slane %v1456, 4
        %v1458 = vadd.f32 %v1456, %v1457
        %v1459 = vrot.slane %v1458, 2
        %v1460 = vadd.f32 %v1458, %v1459
        %v1461 = vrot.slane %v1460, 1
        %v1462 = vadd.f32 %v1460, %v1461
        %v1463 = vadd.f32 %v1453, %v1455
        %v1464 = vrot.slane %v1463, 4
        %v1465 = vadd.f32 %v1463, %v1464
        %v1466 = vrot.slane %v1465, 2
        %v1467 = vadd.f32 %v1465, %v1466
        %v1468 = vrot.slane %v1467, 1
        %v1469 = vadd.f32 %v1467, %v1468
        %v1470 = vmul.f32 %v1405, %v545
        %v1471 = vmul.f32 %v1407, %v546
        %v1472 = vmul.f32 %v1412, %v547
        %v1473 = vmul.f32 %v1414, %v548
        %v1474 = vadd.f32 %v1470, %v1472
        %v1475 = vrot.slane %v1474, 4
        %v1476 = vadd.f32 %v1474, %v1475
        %v1477 = vrot.slane %v1476, 2
        %v1478 = vadd.f32 %v1476, %v1477
        %v1479 = vrot.slane %v1478, 1
        %v1480 = vadd.f32 %v1478, %v1479
        %v1481 = vadd.f32 %v1471, %v1473
        %v1482 = vrot.slane %v1481, 4
        %v1483 = vadd.f32 %v1481, %v1482
        %v1484 = vrot.slane %v1483, 2
        %v1485 = vadd.f32 %v1483, %v1484
        %v1486 = vrot.slane %v1485, 1
        %v1487 = vadd.f32 %v1485, %v1486
        %vm1488 = vcmask 1040384
        %v1489 = vsel %vm1488, %v1426, %v1444
        %v1490 = vsel %vm1488, %v1433, %v1451
        %vm1491 = vcmask 1041408
        %v1492 = vsel %vm1491, %v1489, %v1462
        %v1493 = vsel %vm1491, %v1490, %v1469
        %vm1494 = vcmask 1042432
        %v1495 = vsel %vm1494, %v1492, %v1480
        %v1496 = vsel %vm1494, %v1493, %v1487
        %v1499 = vcombine.low %v1495, %v1496
        %1501 = vst [vmem:[%s291] sm:$0xff] %v1499
        %vm1502 = vcmp.ge.f32.partialorder %v382, 0.0
        %vm1503 = vcmp.le.f32.partialorder %v382, 15.0
        %vm1504 = vmand %vm1502, %vm1503
        %vm1505 = vcmp.ge.f32.partialorder %v383, 0.0
        %vm1506 = vcmp.le.f32.partialorder %v383, 15.0
        %vm1507 = vmand %vm1505, %vm1506
        %vm1508 = vmand %vm1504, %vm1507
        %v1509 = vsel %vm1508, 1, 0
        %v1510 = vcvt.s32.f32 %v1509
        %v1511 = vlaneseq
        %vm1512 = vcmp.ge.s32.totalorder %v1511, 0
        %vm1513 = vcmp.lt.s32.totalorder %v1511, 256
        %vm1514 = vmand %vm1512, %vm1513
        %1515 = vst.msk [vmem:[%s298] sm:$0x3] %vm1514, %v1510
        %s1516 = sand.u32 %s147, 1
        %s1517 = scalar_lea.sflag [#allocation3], %s1516
        %s1518 = sand.u32 %s147, 1
        %s1519 = smul.addr %s1518, 8
        %s1520 = scalar_lea.vmem [#allocation5], %s1519
        %s1521 = sand.u32 %s175, 1
        %s1522 = scalar_lea.sflag [#allocation7], %s1521
        %s1523 = sand.u32 %s175, 1
        %s1524 = smul.addr %s1523, 2
        %s1525 = scalar_lea.vmem [#allocation6], %s1524
        // Predicated region
        $region41: #{tpu_custom_call.1} parent=35 // pred_check
          %p1526 = pneg %p157
        $region42: #{tpu_custom_call.1} parent=35 // pred_check_branch
          %1528 = sbr.rel (%p1526) target = $region44
        $region43: #{tpu_custom_call.1} parent=35 // pred_region
          %s1529 = smul.u32 2, %s29
          %s1531 = ssub.s32 128, 128
          %1532 = vsyncadd %s1517, %s1531
          %s1533 = smul.addr %s28, 2
          %s1534 = sadd.s32 %s1529, %s1533
          %s1535 = smul.addr %s1534, 64
          %s1536 = scalar_lea.hbm %s4, %s1535
          %s1538 = sshll.u32 %s1520, 4
          %s1539 = int_to_ptr.vmem [resolvable:$true] %s1538
          %1541 = dma.vmem_to_hbm [thread:$0]  %s1539, 128, %s1536, %s1517
        $region44: #{tpu_custom_call.1} parent=35 // pred_fallthru
          _
        // Predicated region
        $region45: #{tpu_custom_call.1} parent=35 // pred_check
          %p1542 = pneg %p185
        $region46: #{tpu_custom_call.1} parent=35 // pred_check_branch
          %1544 = sbr.rel (%p1542) target = $region48
        $region47: #{tpu_custom_call.1} parent=35 // pred_region
          %s1545 = smul.u32 2, %s29
          %s1547 = ssub.s32 32, 32
          %1548 = vsyncadd %s1522, %s1547
          %s1549 = smul.addr %s28, 2
          %s1550 = sadd.s32 %s1545, %s1549
          %s1551 = smul.addr %s1550, 16
          %s1552 = scalar_lea.hbm %s5, %s1551
          %s1554 = sshll.u32 %s1525, 4
          %s1555 = int_to_ptr.vmem [resolvable:$true] %s1554
          %1557 = dma.vmem_to_hbm [thread:$0]  %s1555, 32, %s1552, %s1522
        $region48: #{tpu_custom_call.1} parent=35 // pred_fallthru
          _
      $region36: #{tpu_custom_call.1} parent=5 // pred_fallthru
        _
      %p1558 = scmp.le.s32.totalorder 2, %s19
      // Predicated region
      $region49: #{tpu_custom_call.1} parent=5 // pred_check
        %p1559 = pneg %p1558
      $region50: #{tpu_custom_call.1} parent=5 // pred_check_branch
        %1561 = sbr.rel (%p1559) target = $region52
      $region51: #{tpu_custom_call.1} parent=5 // pred_region
        %s1562 = ssub.s32 %s19, 2
        // Predicated region
        $region53: #{tpu_custom_call.1} parent=51 // pred_check
          %p1563 = pneg %p163
        $region54: #{tpu_custom_call.1} parent=51 // pred_check_branch
          %1565 = sbr.rel (%p1563) target = $region56
        $region55: #{tpu_custom_call.1} parent=51 // pred_region
          %s1566 = sand.u32 %s148, 1
          %s1567 = scalar_lea.sflag [#allocation3], %s1566
          %s1568 = sand.u32 %s148, 1
          %s1569 = smul.addr %s1568, 8
          %s1570 = scalar_lea.vmem [#allocation5], %s1569
          %1571 = dma.done %s1567, 128
        $region56: #{tpu_custom_call.1} parent=51 // pred_fallthru
          _
        // Predicated region
        $region57: #{tpu_custom_call.1} parent=51 // pred_check
          %p1572 = pneg %p191
        $region58: #{tpu_custom_call.1} parent=51 // pred_check_branch
          %1574 = sbr.rel (%p1572) target = $region60
        $region59: #{tpu_custom_call.1} parent=51 // pred_region
          %s1575 = sand.u32 %s176, 1
          %s1576 = scalar_lea.sflag [#allocation7], %s1575
          %s1577 = sand.u32 %s176, 1
          %s1578 = smul.addr %s1577, 2
          %s1579 = scalar_lea.vmem [#allocation6], %s1578
          %1580 = dma.done %s1576, 32
        $region60: #{tpu_custom_call.1} parent=51 // pred_fallthru
          _
      $region52: #{tpu_custom_call.1} parent=5 // pred_fallthru
        _
    $region6: #{tpu_custom_call.1} parent=1 // loop_footer
      %s23 = sadd.s32 1, %s19
    $region7: #{tpu_custom_call.1} parent=1 // loop_footer_branch
      %18 = sbr.rel target = $region3
    $region8: #{tpu_custom_call.1} parent=1 // loop_exit
      _
    %1581 = vsyncpa [#allocation3], 1
    %s1582 = scalar_lea.sflag [#allocation3], 1
    %1583 = vsyncpa %s1582, 1
    %1584 = vsyncpa [#allocation7], 1
    %s1585 = scalar_lea.sflag [#allocation7], 1
    %1586 = vsyncpa %s1585, 1
    %1587 = vsyncpa [#allocation4], 1
    %s1588 = scalar_lea.sflag [#allocation4], 1
    %1589 = vsyncpa %s1588, 1

</llo_original>
